<compile_context>
chip_gen: v7x
topology: tpu7x:2x2x1
jax: 0.10.0
libtpu: 0.0.40
codegen_flags: <defaults>
</compile_context>

<pallas_src>
import jax
import jax.numpy as jnp
from jax import lax
from jax.experimental import pallas as pl
from jax.experimental.pallas import tpu as pltpu


def _conv3x3_im2col_kernel(x_ref, w_ref, b_ref, o_ref):
    """3x3 'same' conv of one halo'd row tile, lane-dense store.

    x_ref: (1, TH+2, W+2, Cin)  zero-padded input rows for this tile
    w_ref: (9*Cin, Cout)        im2col weights, k index = (kh*3 + kw)*Cin + ci
    b_ref: (1, Cout)            bias (f32)
    o_ref: (1, TH, W, Cout)     when Cout >= 128 (direct, already lane-dense)
           (1, TH, W*Cout)      otherwise (packed lane-dense)
    """
    xp = x_ref[0]                              # (TH+2, W+2, Cin)
    TH = xp.shape[0] - 2
    W = xp.shape[1] - 2
    K, Cout = w_ref.shape

    # im2col: 3 sublane-shifted kw slabs; kh slices along the major axis are free.
    slabs = [xp[:, kw:kw + W, :] for kw in range(3)]
    taps = [slabs[kw][kh:kh + TH] for kh in range(3) for kw in range(3)]
    patches = jnp.concatenate(taps, axis=-1).reshape(TH * W, K)   # (TH*W, 9*Cin)

    # Single MXU matmul (bf16 x bf16 -> f32 accumulate); bias add stays in f32.
    acc = jnp.dot(patches, w_ref[...], preferred_element_type=jnp.float32)
    acc = acc + b_ref[...].astype(jnp.float32)
    y = acc.astype(o_ref.dtype)

    if len(o_ref.shape) == 4:
        # Cout is already a wide lane dim: store directly, no packing/relayout.
        o_ref[...] = y.reshape(o_ref.shape)
    else:
        # Small Cout: pack W positions onto lanes so the store is wide/unmasked.
        y3 = y.reshape(TH, W, Cout)
        wide = jnp.concatenate([y3[:, wi, :] for wi in range(W)], axis=-1)
        o_ref[...] = wide.reshape(o_ref.shape)


def _conv3x3_row_tiles(x_tiles, w2d, b2d, *, TH, W, vmem_limit_bytes):
    """Runs the tiled conv.  x_tiles: (G, TH+2, W+2, Cin) halo'd row tiles."""
    G, THp2, Wp2, Cin = x_tiles.shape
    K, Cout = w2d.shape
    assert THp2 == TH + 2 and Wp2 == W + 2 and K == 9 * Cin

    direct = Cout >= 128
    if direct:
        out_shape = jax.ShapeDtypeStruct((G, TH, W, Cout), x_tiles.dtype)
        out_spec = pl.BlockSpec((1, TH, W, Cout), lambda t: (t, 0, 0, 0))
    else:
        out_shape = jax.ShapeDtypeStruct((G, TH, W * Cout), x_tiles.dtype)
        out_spec = pl.BlockSpec((1, TH, W * Cout), lambda t: (t, 0, 0))

    itemsize = jnp.dtype(x_tiles.dtype).itemsize
    flops = 2 * G * TH * W * K * Cout
    bytes_accessed = (x_tiles.size * itemsize + w2d.size * itemsize
                      + b2d.size * 4 + G * TH * W * Cout * itemsize)

    return pl.pallas_call(
        _conv3x3_im2col_kernel,
        out_shape=out_shape,
        grid=(G,),
        in_specs=[
            # One halo'd row tile per step: O(TH*W*Cin) working set, auto-pipelined.
            pl.BlockSpec((1, TH + 2, W + 2, Cin), lambda t: (t, 0, 0, 0)),
            # Constant-index blocks (fetched once, kept resident by the pipeline).
            pl.BlockSpec((K, Cout), lambda t: (0, 0)),
            pl.BlockSpec((1, Cout), lambda t: (0, 0)),
        ],
        out_specs=out_spec,
        compiler_params=pltpu.CompilerParams(
            # No cross-step state -> row tiles can be split across v7x's two cores.
            dimension_semantics=("parallel",),
            vmem_limit_bytes=vmem_limit_bytes,
        ),
        cost_estimate=pl.CostEstimate(flops=flops, transcendentals=0,
                                      bytes_accessed=bytes_accessed),
    )(x_tiles, w2d, b2d)


def _pick_row_tile(H, W, target_rows=1024):
    """Divisor of H so that M = TH*W lands around 512-2048 rows, at least min(8,H)."""
    divs = [d for d in range(1, H + 1) if H % d == 0]
    th_max = max(1, (2 * target_rows) // max(W, 1))
    cand = [d for d in divs if d <= th_max]
    th = max(cand) if cand else min(divs)
    lo = min(8, H)
    if th < lo:                      # avoid tiny tiles (halo read amplification)
        bigger = [d for d in divs if d >= lo]
        th = min(bigger) if bigger else H
    return th


def depth_to_space_2d_with_conv(x_nchw, w_hwio, bias, block_size_h, block_size_w,
                                row_tile=None, compute_dtype=jnp.bfloat16,
                                vmem_limit_bytes=48 * 1024 * 1024):
    """Forward pass of DepthToSpace2DWithConv (NCHW in, NCHW out)."""
    # The PyTorch module applies depth_to_space with block_size_h only; its output
    # is only shape-consistent when bs_h == bs_w, so require that explicitly.
    assert block_size_h == block_size_w, "DepthToSpace2DWithConv needs bs_h == bs_w"
    bs = block_size_h
    N, Cin, H, W = x_nchw.shape
    Cout = bs * bs * Cin
    assert w_hwio.shape == (3, 3, Cin, Cout)
    out_dtype = x_nchw.dtype

    TH = _pick_row_tile(H, W) if row_tile is None else int(row_tile)
    if H % TH != 0:
        raise ValueError(f"row_tile={TH} must divide H={H}")
    T = H // TH

    # Host-side packing: transpose + cast + pad + halo-row gather fuse into one pass.
    x_nhwc = jnp.transpose(x_nchw, (0, 2, 3, 1)).astype(compute_dtype)
    xp = jnp.pad(x_nhwc, ((0, 0), (1, 1), (1, 1), (0, 0)))       # (N, H+2, W+2, Cin)
    rows = jnp.arange(T)[:, None] * TH + jnp.arange(TH + 2)[None, :]
    x_tiles = xp[:, rows].reshape(N * T, TH + 2, W + 2, Cin)     # halo'd row tiles

    w2d = w_hwio.reshape(9 * Cin, Cout).astype(compute_dtype)    # k = (kh*3+kw)*Cin + ci
    b2d = bias.reshape(1, Cout).astype(jnp.float32)

    y = _conv3x3_row_tiles(x_tiles, w2d, b2d, TH=TH, W=W,
                           vmem_limit_bytes=vmem_limit_bytes)
    # Both kernel output layouts share the same flat element order -> (N, H, W, Cout).
    y = y.reshape(N, H, W, bs, bs, Cin)
    # Fused DCR depth_to_space + NHWC->NCHW: one reshape/transpose pass (+ final cast).
    out = jnp.transpose(y, (0, 5, 1, 3, 2, 4)).reshape(N, Cin, H * bs, W * bs)
    return out.astype(out_dtype)


# ------------------------- reference (for the self-check) -------------------------

def depth_to_space_nchw(x, block_size):
    """Reference DCR depth-to-space, channels-first (mirrors the PyTorch helper)."""
    N, c, h, w = x.shape
    s = block_size ** 2
    assert c % s == 0
    x = x.reshape(N, block_size, block_size, c // s, h, w)
    x = jnp.transpose(x, (0, 3, 4, 1, 5, 2))
    return x.reshape(N, c // s, h * block_size, w * block_size)


def _reference(x, w_hwio, bias, bs, compute_dtype):
    # Reference built from the same (bf16-rounded) operands, conv math in f32.
    xq = x.astype(compute_dtype).astype(jnp.float32)
    wq = w_hwio.astype(compute_dtype).astype(jnp.float32)
    w_oihw = jnp.transpose(wq, (3, 2, 0, 1))
    y = lax.conv_general_dilated(
        xq, w_oihw, window_strides=(1, 1), padding=((1, 1), (1, 1)),
        dimension_numbers=("NCHW", "OIHW", "NCHW"))
    y = y + bias.astype(jnp.float32)[None, :, None, None]
    return depth_to_space_nchw(y, bs)


if __name__ == "__main__":
    key = jax.random.PRNGKey(0)

    # Config 1 (small-channel / packed-store path): batch=2, Cin=4, 16x16, block 2x2.
    N, Cin, H, W = 2, 4, 16, 16
    bs_h = bs_w = 2
    Cout = bs_h * bs_w * Cin  # 16
    k1, k2, k3, key = jax.random.split(key, 4)
    x = jax.random.normal(k1, (N, Cin, H, W), jnp.float32)
    w_hwio = jax.random.normal(k2, (3, 3, Cin, Cout), jnp.float32) * 0.1
    bias = jax.random.normal(k3, (Cout,), jnp.float32) * 0.1

    fwd = jax.jit(lambda a, b, c: depth_to_space_2d_with_conv(a, b, c, bs_h, bs_w))
    out = jax.block_until_ready(fwd(x, w_hwio, bias))
    assert out.shape == (N, Cin, H * bs_h, W * bs_w), out.shape
    ref = _reference(x, w_hwio, bias, bs_h, jnp.bfloat16)
    assert jnp.allclose(out, ref, rtol=2e-2, atol=2e-2), \
        float(jnp.max(jnp.abs(out - ref)))

    # Config 2 (direct lane-dense store path, Cout >= 128): batch=1, Cin=32, 8x8, block 2x2.
    N2, Cin2, H2, W2 = 1, 32, 8, 8
    Cout2 = bs_h * bs_w * Cin2  # 128
    k1, k2, k3, key = jax.random.split(key, 4)
    x2 = jax.random.normal(k1, (N2, Cin2, H2, W2), jnp.float32)
    w2 = jax.random.normal(k2, (3, 3, Cin2, Cout2), jnp.float32) * 0.05
    b2 = jax.random.normal(k3, (Cout2,), jnp.float32) * 0.1
    fwd2 = jax.jit(lambda a, b, c: depth_to_space_2d_with_conv(a, b, c, bs_h, bs_w))
    out2 = jax.block_until_ready(fwd2(x2, w2, b2))
    assert out2.shape == (N2, Cin2, H2 * bs_h, W2 * bs_w), out2.shape
    ref2 = _reference(x2, w2, b2, bs_h, jnp.bfloat16)
    assert jnp.allclose(out2, ref2, rtol=2e-2, atol=2e-2), \
        float(jnp.max(jnp.abs(out2 - ref2)))

    print("KERNEL_OK")
</pallas_src>

<mosaic_0001>
module attributes {stable_mosaic.version = 11 : i64} {
  func.func @_conv3x3_im2col_kernel(%arg0: i32, %arg1: memref<1x18x18x4xbf16, #tpu.memory_space<vmem>>, %arg2: memref<36x16xbf16, #tpu.memory_space<vmem>>, %arg3: memref<1x16xf32, #tpu.memory_space<vmem>>, %arg4: memref<1x16x256xbf16, #tpu.memory_space<vmem>>) attributes {dimension_semantics = [#tpu.dimension_semantics<parallel>], iteration_bounds = array<i64: 2>, scalar_prefetch = 0 : i64, scratch_operands = 0 : i64, tpu.core_type = #tpu.core_type<tc>, window_params = [{transform_indices = @transform_0, window_bounds = array<i64: 1, 18, 18, 4>}, {pipeline_mode = #tpu.pipeline_mode<synchronous>, transform_indices = @transform_1, window_bounds = array<i64: 36, 16>}, {pipeline_mode = #tpu.pipeline_mode<synchronous>, transform_indices = @transform_2, window_bounds = array<i64: 1, 16>}, {transform_indices = @transform_3, window_bounds = array<i64: 1, 16, 256>}]} {
    %c0 = arith.constant 0 : index
    %c0_0 = arith.constant 0 : index
    %c0_1 = arith.constant 0 : index
    %c0_2 = arith.constant 0 : index
    %0 = vector.load %arg1[%c0, %c0_0, %c0_1, %c0_2] : memref<1x18x18x4xbf16, #tpu.memory_space<vmem>>, vector<1x18x18x4xbf16>
    %1 = vector.shape_cast %0 : vector<1x18x18x4xbf16> to vector<18x18x4xbf16>
    %2 = vector.extract_strided_slice %1 {offsets = [0, 0, 0], sizes = [18, 16, 4], strides = [1, 1, 1]} : vector<18x18x4xbf16> to vector<18x16x4xbf16>
    %3 = vector.extract_strided_slice %1 {offsets = [0, 1, 0], sizes = [18, 16, 4], strides = [1, 1, 1]} : vector<18x18x4xbf16> to vector<18x16x4xbf16>
    %4 = vector.extract_strided_slice %1 {offsets = [0, 2, 0], sizes = [18, 16, 4], strides = [1, 1, 1]} : vector<18x18x4xbf16> to vector<18x16x4xbf16>
    %5 = vector.extract_strided_slice %2 {offsets = [0, 0, 0], sizes = [16, 16, 4], strides = [1, 1, 1]} : vector<18x16x4xbf16> to vector<16x16x4xbf16>
    %6 = vector.extract_strided_slice %3 {offsets = [0, 0, 0], sizes = [16, 16, 4], strides = [1, 1, 1]} : vector<18x16x4xbf16> to vector<16x16x4xbf16>
    %7 = vector.extract_strided_slice %4 {offsets = [0, 0, 0], sizes = [16, 16, 4], strides = [1, 1, 1]} : vector<18x16x4xbf16> to vector<16x16x4xbf16>
    %8 = vector.extract_strided_slice %2 {offsets = [1, 0, 0], sizes = [16, 16, 4], strides = [1, 1, 1]} : vector<18x16x4xbf16> to vector<16x16x4xbf16>
    %9 = vector.extract_strided_slice %3 {offsets = [1, 0, 0], sizes = [16, 16, 4], strides = [1, 1, 1]} : vector<18x16x4xbf16> to vector<16x16x4xbf16>
    %10 = vector.extract_strided_slice %4 {offsets = [1, 0, 0], sizes = [16, 16, 4], strides = [1, 1, 1]} : vector<18x16x4xbf16> to vector<16x16x4xbf16>
    %11 = vector.extract_strided_slice %2 {offsets = [2, 0, 0], sizes = [16, 16, 4], strides = [1, 1, 1]} : vector<18x16x4xbf16> to vector<16x16x4xbf16>
    %12 = vector.extract_strided_slice %3 {offsets = [2, 0, 0], sizes = [16, 16, 4], strides = [1, 1, 1]} : vector<18x16x4xbf16> to vector<16x16x4xbf16>
    %13 = vector.extract_strided_slice %4 {offsets = [2, 0, 0], sizes = [16, 16, 4], strides = [1, 1, 1]} : vector<18x16x4xbf16> to vector<16x16x4xbf16>
    %14 = tpu.concatenate %5, %6, %7, %8, %9, %10, %11, %12, %13 in 2 : vector<16x16x4xbf16>, vector<16x16x4xbf16>, vector<16x16x4xbf16>, vector<16x16x4xbf16>, vector<16x16x4xbf16>, vector<16x16x4xbf16>, vector<16x16x4xbf16>, vector<16x16x4xbf16>, vector<16x16x4xbf16> -> vector<16x16x36xbf16>
    %15 = vector.shape_cast %14 : vector<16x16x36xbf16> to vector<256x36xbf16>
    %c0_3 = arith.constant 0 : index
    %c0_4 = arith.constant 0 : index
    %16 = vector.load %arg2[%c0_3, %c0_4] : memref<36x16xbf16, #tpu.memory_space<vmem>>, vector<36x16xbf16>
    %cst = arith.constant dense<0.000000e+00> : vector<256x16xf32>
    %17 = tpu.matmul %15, %16, %cst {dimension_numbers = #tpu.dot_dimension_numbers<[1], [0], [0], [1], [0, 0, 1, 1], [], []>} : vector<256x36xbf16>, vector<36x16xbf16>, vector<256x16xf32> -> vector<256x16xf32>
    %c0_5 = arith.constant 0 : index
    %c0_6 = arith.constant 0 : index
    %18 = vector.load %arg3[%c0_5, %c0_6] : memref<1x16xf32, #tpu.memory_space<vmem>>, vector<1x16xf32>
    %19 = vector.broadcast %18 : vector<1x16xf32> to vector<256x16xf32>
    %20 = arith.addf %17, %19 : vector<256x16xf32>
    %21 = arith.truncf %20 : vector<256x16xf32> to vector<256x16xbf16>
    %22 = vector.shape_cast %21 : vector<256x16xbf16> to vector<16x16x16xbf16>
    %23 = vector.extract_strided_slice %22 {offsets = [0, 0, 0], sizes = [16, 1, 16], strides = [1, 1, 1]} : vector<16x16x16xbf16> to vector<16x1x16xbf16>
    %24 = vector.shape_cast %23 : vector<16x1x16xbf16> to vector<16x16xbf16>
    %25 = vector.extract_strided_slice %22 {offsets = [0, 1, 0], sizes = [16, 1, 16], strides = [1, 1, 1]} : vector<16x16x16xbf16> to vector<16x1x16xbf16>
    %26 = vector.shape_cast %25 : vector<16x1x16xbf16> to vector<16x16xbf16>
    %27 = vector.extract_strided_slice %22 {offsets = [0, 2, 0], sizes = [16, 1, 16], strides = [1, 1, 1]} : vector<16x16x16xbf16> to vector<16x1x16xbf16>
    %28 = vector.shape_cast %27 : vector<16x1x16xbf16> to vector<16x16xbf16>
    %29 = vector.extract_strided_slice %22 {offsets = [0, 3, 0], sizes = [16, 1, 16], strides = [1, 1, 1]} : vector<16x16x16xbf16> to vector<16x1x16xbf16>
    %30 = vector.shape_cast %29 : vector<16x1x16xbf16> to vector<16x16xbf16>
    %31 = vector.extract_strided_slice %22 {offsets = [0, 4, 0], sizes = [16, 1, 16], strides = [1, 1, 1]} : vector<16x16x16xbf16> to vector<16x1x16xbf16>
    %32 = vector.shape_cast %31 : vector<16x1x16xbf16> to vector<16x16xbf16>
    %33 = vector.extract_strided_slice %22 {offsets = [0, 5, 0], sizes = [16, 1, 16], strides = [1, 1, 1]} : vector<16x16x16xbf16> to vector<16x1x16xbf16>
    %34 = vector.shape_cast %33 : vector<16x1x16xbf16> to vector<16x16xbf16>
    %35 = vector.extract_strided_slice %22 {offsets = [0, 6, 0], sizes = [16, 1, 16], strides = [1, 1, 1]} : vector<16x16x16xbf16> to vector<16x1x16xbf16>
    %36 = vector.shape_cast %35 : vector<16x1x16xbf16> to vector<16x16xbf16>
    %37 = vector.extract_strided_slice %22 {offsets = [0, 7, 0], sizes = [16, 1, 16], strides = [1, 1, 1]} : vector<16x16x16xbf16> to vector<16x1x16xbf16>
    %38 = vector.shape_cast %37 : vector<16x1x16xbf16> to vector<16x16xbf16>
    %39 = vector.extract_strided_slice %22 {offsets = [0, 8, 0], sizes = [16, 1, 16], strides = [1, 1, 1]} : vector<16x16x16xbf16> to vector<16x1x16xbf16>
    %40 = vector.shape_cast %39 : vector<16x1x16xbf16> to vector<16x16xbf16>
    %41 = vector.extract_strided_slice %22 {offsets = [0, 9, 0], sizes = [16, 1, 16], strides = [1, 1, 1]} : vector<16x16x16xbf16> to vector<16x1x16xbf16>
    %42 = vector.shape_cast %41 : vector<16x1x16xbf16> to vector<16x16xbf16>
    %43 = vector.extract_strided_slice %22 {offsets = [0, 10, 0], sizes = [16, 1, 16], strides = [1, 1, 1]} : vector<16x16x16xbf16> to vector<16x1x16xbf16>
    %44 = vector.shape_cast %43 : vector<16x1x16xbf16> to vector<16x16xbf16>
    %45 = vector.extract_strided_slice %22 {offsets = [0, 11, 0], sizes = [16, 1, 16], strides = [1, 1, 1]} : vector<16x16x16xbf16> to vector<16x1x16xbf16>
    %46 = vector.shape_cast %45 : vector<16x1x16xbf16> to vector<16x16xbf16>
    %47 = vector.extract_strided_slice %22 {offsets = [0, 12, 0], sizes = [16, 1, 16], strides = [1, 1, 1]} : vector<16x16x16xbf16> to vector<16x1x16xbf16>
    %48 = vector.shape_cast %47 : vector<16x1x16xbf16> to vector<16x16xbf16>
    %49 = vector.extract_strided_slice %22 {offsets = [0, 13, 0], sizes = [16, 1, 16], strides = [1, 1, 1]} : vector<16x16x16xbf16> to vector<16x1x16xbf16>
    %50 = vector.shape_cast %49 : vector<16x1x16xbf16> to vector<16x16xbf16>
    %51 = vector.extract_strided_slice %22 {offsets = [0, 14, 0], sizes = [16, 1, 16], strides = [1, 1, 1]} : vector<16x16x16xbf16> to vector<16x1x16xbf16>
    %52 = vector.shape_cast %51 : vector<16x1x16xbf16> to vector<16x16xbf16>
    %53 = vector.extract_strided_slice %22 {offsets = [0, 15, 0], sizes = [16, 1, 16], strides = [1, 1, 1]} : vector<16x16x16xbf16> to vector<16x1x16xbf16>
    %54 = vector.shape_cast %53 : vector<16x1x16xbf16> to vector<16x16xbf16>
    %55 = tpu.concatenate %24, %26, %28, %30, %32, %34, %36, %38, %40, %42, %44, %46, %48, %50, %52, %54 in 1 : vector<16x16xbf16>, vector<16x16xbf16>, vector<16x16xbf16>, vector<16x16xbf16>, vector<16x16xbf16>, vector<16x16xbf16>, vector<16x16xbf16>, vector<16x16xbf16>, vector<16x16xbf16>, vector<16x16xbf16>, vector<16x16xbf16>, vector<16x16xbf16>, vector<16x16xbf16>, vector<16x16xbf16>, vector<16x16xbf16>, vector<16x16xbf16> -> vector<16x256xbf16>
    %56 = vector.shape_cast %55 : vector<16x256xbf16> to vector<1x16x256xbf16>
    %c0_7 = arith.constant 0 : index
    %c0_8 = arith.constant 0 : index
    %c0_9 = arith.constant 0 : index
    %57 = vector.load %arg4[%c0_7, %c0_8, %c0_9] : memref<1x16x256xbf16, #tpu.memory_space<vmem>>, vector<1x16x256xbf16>
    tpu.vector_store %arg4[%c0_7, %c0_8, %c0_9], %56 {strides = array<i32>} : memref<1x16x256xbf16, #tpu.memory_space<vmem>>, vector<1x16x256xbf16>,
    return
  }
  func.func @transform_0(%arg0: i32) -> (i32, i32, i32, i32) {
    %c0_i32 = arith.constant 0 : i32
    %c0_i32_0 = arith.constant 0 : i32
    %c0_i32_1 = arith.constant 0 : i32
    %c0_i32_2 = arith.constant 0 : i32
    return %arg0, %c0_i32, %c0_i32_0, %c0_i32_1 : i32, i32, i32, i32
  }
  func.func @transform_1(%arg0: i32) -> (i32, i32) {
    %c0_i32 = arith.constant 0 : i32
    %c0_i32_0 = arith.constant 0 : i32
    %c0_i32_1 = arith.constant 0 : i32
    return %c0_i32, %c0_i32_0 : i32, i32
  }
  func.func @transform_2(%arg0: i32) -> (i32, i32) {
    %c0_i32 = arith.constant 0 : i32
    %c0_i32_0 = arith.constant 0 : i32
    %c0_i32_1 = arith.constant 0 : i32
    return %c0_i32, %c0_i32_0 : i32, i32
  }
  func.func @transform_3(%arg0: i32) -> (i32, i32, i32) {
    %c0_i32 = arith.constant 0 : i32
    %c0_i32_0 = arith.constant 0 : i32
    %c0_i32_1 = arith.constant 0 : i32
    return %arg0, %c0_i32, %c0_i32_0 : i32, i32, i32
  }
}

</mosaic_0001>

<llo_original>
// kernel: _lambda_.1
$region0: #{_lambda_.1}
  #allocation0 [shape = 'u32[]', space=smem, size = 0x4, offset = 0x4, fixed_abs, tag = 'smem constant byte address 0x4 - core index']
  #allocation1 [shape = 'u32[144,128]{1,0:T(1,128)}', space=vmem, size = 0x12000, scoped, tag = 'internal scratch']
  %s0 = inlined_call_operand.vmem [shape: bf16[2,18,18,4], index: 0, kind: input, shape index: {}]
  %s1 = inlined_call_operand.vmem [shape: bf16[36,16], index: 1, kind: input, shape index: {}]
  %s2 = inlined_call_operand.vmem [shape: f32[1,16], index: 2, kind: input, shape index: {}]
  %s3 = inlined_call_operand.vmem [shape: bf16[2,16,256], index: 3, kind: output, shape index: {}]
  %s4 = sld [smem:[#allocation0]]
  $region45: #{_lambda_.1} parent=0
    _
  %s6 = ssub.s32 1, %s4
  %s7 = scalar_select 0, %s6, %s4
  loop: start=0, step=1, limit=4
  $region2: #{_lambda_.1} parent=0 // loop_pre_header
    _
  $region3: #{_lambda_.1} parent=0 // loop_header
    %s9 = sphi 0, %s13
    %p10 = scmp.ge.s32.totalorder %s9, 4
    %s19 = sphi 0, %s21
    %s22 = sphi 0, %s19
    %s23 = sphi 0, %s22
    %s39 = sphi 0, %s23
    %s43 = sphi 0, %s43
    %s45 = sphi 0, %s43
    %s46 = sphi 0, %s45
    %s60 = sphi 0, %s46
    %s64 = sphi 0, %s64
    %s66 = sphi 0, %s64
    %s67 = sphi 0, %s66
    %s81 = sphi 0, %s67
    %s87 = sphi 0, %s89
    %s90 = sphi 0, %s87
    %s91 = sphi 0, %s90
    %s107 = sphi 0, %s91
  $region4: #{_lambda_.1} parent=0 // loop_header_branch
    %12 = sbr.rel (%p10) target = $region8
  $region5: #{_lambda_.1} parent=0 // loop_body
    %s14 = ssub.s32 %s9, 1
    %s15 = ssub.s32 %s9, 2
    %s16 = sadd.s32 %s9, 1
    %s17 = ssub.s32 %s9, %s16
    %p18 = scmp.eq.s32.totalorder %s17, 0
    %s20 = sadd.s32 %s19, 1
    %s21 = scalar_select %p18, %s19, %s20
    %p24 = pneg %p18
    %p25 = scmp.eq.s32.totalorder %s9, 1
    %p26 = por %p24, %p25
    %p27 = scmp.ne.s32.totalorder %s19, %s22
    %p28 = scmp.eq.s32.totalorder %s9, 0
    %p29 = por %p27, %p28
    %p30 = scmp.ne.s32.totalorder %s19, %s22
    %p31 = scmp.eq.s32.totalorder %s14, 1
    %p32 = por %p30, %p31
    %p33 = scmp.ne.s32.totalorder %s22, %s23
    %p34 = scmp.eq.s32.totalorder %s14, 0
    %p35 = por %p33, %p34
    %p36 = scmp.ne.s32.totalorder %s22, %s23
    %p37 = scmp.eq.s32.totalorder %s15, 1
    %p38 = por %p36, %p37
    %p40 = scmp.ne.s32.totalorder %s23, %s39
    %p41 = scmp.eq.s32.totalorder %s15, 0
    %p42 = por %p40, %p41
    %s44 = sadd.s32 %s43, 1
    %p47 = scmp.eq.s32.totalorder %s9, 1
    %p48 = scmp.ne.s32.totalorder %s43, %s45
    %p49 = scmp.eq.s32.totalorder %s9, 0
    %p50 = por %p48, %p49
    %p51 = scmp.ne.s32.totalorder %s43, %s45
    %p52 = scmp.eq.s32.totalorder %s14, 1
    %p53 = por %p51, %p52
    %p54 = scmp.ne.s32.totalorder %s45, %s46
    %p55 = scmp.eq.s32.totalorder %s14, 0
    %p56 = por %p54, %p55
    %p57 = scmp.ne.s32.totalorder %s45, %s46
    %p58 = scmp.eq.s32.totalorder %s15, 1
    %p59 = por %p57, %p58
    %p61 = scmp.ne.s32.totalorder %s46, %s60
    %p62 = scmp.eq.s32.totalorder %s15, 0
    %p63 = por %p61, %p62
    %s65 = sadd.s32 %s64, 1
    %p68 = scmp.eq.s32.totalorder %s9, 1
    %p69 = scmp.ne.s32.totalorder %s64, %s66
    %p70 = scmp.eq.s32.totalorder %s9, 0
    %p71 = por %p69, %p70
    %p72 = scmp.ne.s32.totalorder %s64, %s66
    %p73 = scmp.eq.s32.totalorder %s14, 1
    %p74 = por %p72, %p73
    %p75 = scmp.ne.s32.totalorder %s66, %s67
    %p76 = scmp.eq.s32.totalorder %s14, 0
    %p77 = por %p75, %p76
    %p78 = scmp.ne.s32.totalorder %s66, %s67
    %p79 = scmp.eq.s32.totalorder %s15, 1
    %p80 = por %p78, %p79
    %p82 = scmp.ne.s32.totalorder %s67, %s81
    %p83 = scmp.eq.s32.totalorder %s15, 0
    %p84 = por %p82, %p83
    %s85 = ssub.s32 %s9, %s16
    %p86 = scmp.eq.s32.totalorder %s85, 0
    %s88 = sadd.s32 %s87, 1
    %s89 = scalar_select %p86, %s87, %s88
    %p92 = pneg %p86
    %p93 = scmp.eq.s32.totalorder %s9, 1
    %p94 = por %p92, %p93
    %p95 = scmp.ne.s32.totalorder %s87, %s90
    %p96 = scmp.eq.s32.totalorder %s9, 0
    %p97 = por %p95, %p96
    %p98 = scmp.ne.s32.totalorder %s87, %s90
    %p99 = scmp.eq.s32.totalorder %s14, 1
    %p100 = por %p98, %p99
    %p101 = scmp.ne.s32.totalorder %s90, %s91
    %p102 = scmp.eq.s32.totalorder %s14, 0
    %p103 = por %p101, %p102
    %p104 = scmp.ne.s32.totalorder %s90, %s91
    %p105 = scmp.eq.s32.totalorder %s15, 1
    %p106 = por %p104, %p105
    %p108 = scmp.ne.s32.totalorder %s91, %s107
    %p109 = scmp.eq.s32.totalorder %s15, 0
    %p110 = por %p108, %p109
    %p111 = scmp.le.s32.totalorder 1, %s9
    %p112 = scmp.lt.s32.totalorder %s9, 3
    %p113 = pnand %p111, %p112
    %p114 = pneg %p113
    // Predicated region
    $region9: #{_lambda_.1} parent=5 // pred_check
      _
    $region10: #{_lambda_.1} parent=5 // pred_check_branch
      %116 = sbr.rel (%p113) target = $region12
    $region11: #{_lambda_.1} parent=5 // pred_region
      %s117 = ssub.s32 %s9, 1
      // Predicated region
      $region13: #{_lambda_.1} parent=11 // pred_check
        %p118 = pneg %p56
      $region14: #{_lambda_.1} parent=11 // pred_check_branch
        %120 = sbr.rel (%p118) target = $region16
      $region15: #{_lambda_.1} parent=11 // pred_region
        _
      $region16: #{_lambda_.1} parent=11 // pred_fallthru
        _
      // Predicated region
      $region17: #{_lambda_.1} parent=11 // pred_check
        %p121 = pneg %p77
      $region18: #{_lambda_.1} parent=11 // pred_check_branch
        %123 = sbr.rel (%p121) target = $region20
      $region19: #{_lambda_.1} parent=11 // pred_region
        _
      $region20: #{_lambda_.1} parent=11 // pred_fallthru
        _
    $region12: #{_lambda_.1} parent=5 // pred_fallthru
      _
    %p124 = scmp.lt.s32.totalorder %s9, 2
    // Predicated region
    $region21: #{_lambda_.1} parent=5 // pred_check
      %p125 = pneg %p124
    $region22: #{_lambda_.1} parent=5 // pred_check_branch
      %127 = sbr.rel (%p125) target = $region24
    $region23: #{_lambda_.1} parent=5 // pred_region
      // Predicated region
      $region25: #{_lambda_.1} parent=23 // pred_check
        %p128 = pneg %p29
      $region26: #{_lambda_.1} parent=23 // pred_check_branch
        %130 = sbr.rel (%p128) target = $region28
      $region27: #{_lambda_.1} parent=23 // pred_region
        %p131 = scmp.lt.s32.totalorder %s9, 1
        %s132 = scalar_select %p131, %s9, 1
        %s133 = smul.addr %s132, 54
        %s134 = smul.addr %s133, 4
        %s135 = scalar_lea.vmem %s0, %s134
      $region28: #{_lambda_.1} parent=23 // pred_fallthru
        _
    $region24: #{_lambda_.1} parent=5 // pred_fallthru
      _
    %p136 = scmp.le.s32.totalorder 1, %s9
    %p137 = scmp.lt.s32.totalorder %s9, 3
    %p138 = pnand %p136, %p137
    %p139 = pneg %p138
    // Predicated region
    $region29: #{_lambda_.1} parent=5 // pred_check
      _
    $region30: #{_lambda_.1} parent=5 // pred_check_branch
      %141 = sbr.rel (%p138) target = $region32
    $region31: #{_lambda_.1} parent=5 // pred_region
      %s142 = ssub.s32 %s9, 1
      %p143 = scmp.lt.s32.totalorder %s14, 1
      %s144 = scalar_select %p143, %s14, 1
      %s145 = smul.addr %s144, 54
      %s146 = smul.addr %s145, 4
      %s147 = scalar_lea.vmem %s0, %s146
      %p148 = pneg %p35
      %p149 = pneg %p32
      %p150 = pneg %p56
      %p151 = pneg %p53
      %p152 = pneg %p77
      %p153 = pneg %p74
      %p154 = pneg %p103
      %p155 = pneg %p100
      %p156 = scmp.lt.s32.totalorder %s14, 1
      %s157 = scalar_select %p156, %s14, 1
      %s158 = smul.addr %s157, 4
      %s159 = smul.addr %s158, 4
      %s160 = scalar_lea.vmem %s3, %s159
      %p161 = scmp.lt.s32.totalorder %s14, 1
      %s162 = scalar_select %p161, %s14, 1
      %s163 = smul.addr %s162, 54
      %s164 = smul.addr %s163, 4
      %s165 = scalar_lea.vmem %s0, %s164
      %p166 = scmp.lt.s32.totalorder %s14, 1
      %s167 = scalar_select %p166, %s14, 1
      %s168 = smul.addr %s167, 4
      %s169 = smul.addr %s168, 4
      %s170 = scalar_lea.vmem %s3, %s169
      %v172 = vld [vmem:[%s165] sm:$0xf]
      %v173 = vld [vmem:[%s165 + $0x4] sm:$0xf]
      %v174 = vld [vmem:[%s165 + $0x8] sm:$0x1]
      %v175 = vld [vmem:[%s165 + $0xc] sm:$0xf]
      %v176 = vld [vmem:[%s165 + $0x10] sm:$0xf]
      %v177 = vld [vmem:[%s165 + $0x14] sm:$0x1]
      %v178 = vld [vmem:[%s165 + $0x18] sm:$0xf]
      %v179 = vld [vmem:[%s165 + $0x1c] sm:$0xf]
      %v180 = vld [vmem:[%s165 + $0x20] sm:$0x1]
      %v181 = vld [vmem:[%s165 + $0x24] sm:$0xf]
      %v182 = vld [vmem:[%s165 + $0x28] sm:$0xf]
      %v183 = vld [vmem:[%s165 + $0x2c] sm:$0x1]
      %v184 = vld [vmem:[%s165 + $0x30] sm:$0xf]
      %v185 = vld [vmem:[%s165 + $0x34] sm:$0xf]
      %v186 = vld [vmem:[%s165 + $0x38] sm:$0x1]
      %v187 = vld [vmem:[%s165 + $0x3c] sm:$0xf]
      %v188 = vld [vmem:[%s165 + $0x40] sm:$0xf]
      %v189 = vld [vmem:[%s165 + $0x44] sm:$0x1]
      %v190 = vld [vmem:[%s165 + $0x48] sm:$0xf]
      %v191 = vld [vmem:[%s165 + $0x4c] sm:$0xf]
      %v192 = vld [vmem:[%s165 + $0x50] sm:$0x1]
      %v193 = vld [vmem:[%s165 + $0x54] sm:$0xf]
      %v194 = vld [vmem:[%s165 + $0x58] sm:$0xf]
      %v195 = vld [vmem:[%s165 + $0x5c] sm:$0x1]
      %v196 = vld [vmem:[%s165 + $0x60] sm:$0xf]
      %v197 = vld [vmem:[%s165 + $0x64] sm:$0xf]
      %v198 = vld [vmem:[%s165 + $0x68] sm:$0x1]
      %v199 = vld [vmem:[%s165 + $0x6c] sm:$0xf]
      %v200 = vld [vmem:[%s165 + $0x70] sm:$0xf]
      %v201 = vld [vmem:[%s165 + $0x74] sm:$0x1]
      %v202 = vld [vmem:[%s165 + $0x78] sm:$0xf]
      %v203 = vld [vmem:[%s165 + $0x7c] sm:$0xf]
      %v204 = vld [vmem:[%s165 + $0x80] sm:$0x1]
      %v205 = vld [vmem:[%s165 + $0x84] sm:$0xf]
      %v206 = vld [vmem:[%s165 + $0x88] sm:$0xf]
      %v207 = vld [vmem:[%s165 + $0x8c] sm:$0x1]
      %v208 = vld [vmem:[%s165 + $0x90] sm:$0xf]
      %v209 = vld [vmem:[%s165 + $0x94] sm:$0xf]
      %v210 = vld [vmem:[%s165 + $0x98] sm:$0x1]
      %v211 = vld [vmem:[%s165 + $0x9c] sm:$0xf]
      %v212 = vld [vmem:[%s165 + $0xa0] sm:$0xf]
      %v213 = vld [vmem:[%s165 + $0xa4] sm:$0x1]
      %v214 = vld [vmem:[%s165 + $0xa8] sm:$0xf]
      %v215 = vld [vmem:[%s165 + $0xac] sm:$0xf]
      %v216 = vld [vmem:[%s165 + $0xb0] sm:$0x1]
      %v217 = vld [vmem:[%s165 + $0xb4] sm:$0xf]
      %v218 = vld [vmem:[%s165 + $0xb8] sm:$0xf]
      %v219 = vld [vmem:[%s165 + $0xbc] sm:$0x1]
      %v220 = vld [vmem:[%s165 + $0xc0] sm:$0xf]
      %v221 = vld [vmem:[%s165 + $0xc4] sm:$0xf]
      %v222 = vld [vmem:[%s165 + $0xc8] sm:$0x1]
      %v223 = vld [vmem:[%s165 + $0xcc] sm:$0xf]
      %v224 = vld [vmem:[%s165 + $0xd0] sm:$0xf]
      %v225 = vld [vmem:[%s165 + $0xd4] sm:$0x1]
      %v258 = vunpack.c.l.b16 %v172
      %v259 = vunpack.c.l.b16 %v173
      %v260 = vunpack.c.l.b16 %v175
      %v261 = vunpack.c.l.b16 %v176
      %v262 = vunpack.c.l.b16 %v178
      %v263 = vunpack.c.l.b16 %v179
      %v264 = vunpack.c.l.b16 %v181
      %v265 = vunpack.c.l.b16 %v182
      %v266 = vunpack.c.l.b16 %v184
      %v267 = vunpack.c.l.b16 %v185
      %v268 = vunpack.c.l.b16 %v187
      %v269 = vunpack.c.l.b16 %v188
      %v270 = vunpack.c.l.b16 %v190
      %v271 = vunpack.c.l.b16 %v191
      %v272 = vunpack.c.l.b16 %v193
      %v273 = vunpack.c.l.b16 %v194
      %v274 = vunpack.c.l.b16 %v196
      %v275 = vunpack.c.l.b16 %v197
      %v276 = vunpack.c.l.b16 %v199
      %v277 = vunpack.c.l.b16 %v200
      %v278 = vunpack.c.l.b16 %v202
      %v279 = vunpack.c.l.b16 %v203
      %v280 = vunpack.c.l.b16 %v205
      %v281 = vunpack.c.l.b16 %v206
      %v282 = vunpack.c.l.b16 %v208
      %v283 = vunpack.c.l.b16 %v209
      %v284 = vunpack.c.l.b16 %v211
      %v285 = vunpack.c.l.b16 %v212
      %v286 = vunpack.c.l.b16 %v214
      %v287 = vunpack.c.l.b16 %v215
      %v288 = vunpack.c.l.b16 %v217
      %v289 = vunpack.c.l.b16 %v218
      %v290 = vpack.c.b16 %v259, %v258
      %v291 = vpack.c.b16 %v261, %v260
      %v292 = vpack.c.b16 %v263, %v262
      %v293 = vpack.c.b16 %v265, %v264
      %v294 = vpack.c.b16 %v267, %v266
      %v295 = vpack.c.b16 %v269, %v268
      %v296 = vpack.c.b16 %v271, %v270
      %v297 = vpack.c.b16 %v273, %v272
      %v298 = vpack.c.b16 %v275, %v274
      %v299 = vpack.c.b16 %v277, %v276
      %v300 = vpack.c.b16 %v279, %v278
      %v301 = vpack.c.b16 %v281, %v280
      %v302 = vpack.c.b16 %v283, %v282
      %v303 = vpack.c.b16 %v285, %v284
      %v304 = vpack.c.b16 %v287, %v286
      %v305 = vpack.c.b16 %v289, %v288
      %v322 = vunpack.c.l.b16 %v174
      %v323 = vunpack.c.l.b16 %v177
      %v324 = vunpack.c.l.b16 %v180
      %v325 = vunpack.c.l.b16 %v183
      %v326 = vunpack.c.l.b16 %v186
      %v327 = vunpack.c.l.b16 %v189
      %v328 = vunpack.c.l.b16 %v192
      %v329 = vunpack.c.l.b16 %v195
      %v330 = vunpack.c.l.b16 %v198
      %v331 = vunpack.c.l.b16 %v201
      %v332 = vunpack.c.l.b16 %v204
      %v333 = vunpack.c.l.b16 %v207
      %v334 = vunpack.c.l.b16 %v210
      %v335 = vunpack.c.l.b16 %v213
      %v336 = vunpack.c.l.b16 %v216
      %v337 = vunpack.c.l.b16 %v219
      %v338 = vpack.c.b16 %v322, %v322
      %v339 = vpack.c.b16 %v323, %v323
      %v340 = vpack.c.b16 %v324, %v324
      %v341 = vpack.c.b16 %v325, %v325
      %v342 = vpack.c.b16 %v326, %v326
      %v343 = vpack.c.b16 %v327, %v327
      %v344 = vpack.c.b16 %v328, %v328
      %v345 = vpack.c.b16 %v329, %v329
      %v346 = vpack.c.b16 %v330, %v330
      %v347 = vpack.c.b16 %v331, %v331
      %v348 = vpack.c.b16 %v332, %v332
      %v349 = vpack.c.b16 %v333, %v333
      %v350 = vpack.c.b16 %v334, %v334
      %v351 = vpack.c.b16 %v335, %v335
      %v352 = vpack.c.b16 %v336, %v336
      %v353 = vpack.c.b16 %v337, %v337
      %vm354 = vsmask.f32 7424
      %v356 = vshrl.u32 %v290, 16
      %v358 = vshll.u32 %v290, 16
      %v360 = vrot.slane %v358, 1
      %v361 = vor.u32 %v356, %v360
      %v363 = vshll.u32 %v338, 16
      %v365 = vrot.slane %v363, 1
      %v366 = vsel %vm354, %v361, %v365
      %v368 = vshrl.u32 %v291, 16
      %v370 = vshll.u32 %v291, 16
      %v372 = vrot.slane %v370, 1
      %v373 = vor.u32 %v368, %v372
      %v375 = vshll.u32 %v339, 16
      %v377 = vrot.slane %v375, 1
      %v378 = vsel %vm354, %v373, %v377
      %v380 = vshrl.u32 %v292, 16
      %v382 = vshll.u32 %v292, 16
      %v384 = vrot.slane %v382, 1
      %v385 = vor.u32 %v380, %v384
      %v387 = vshll.u32 %v340, 16
      %v389 = vrot.slane %v387, 1
      %v390 = vsel %vm354, %v385, %v389
      %v392 = vshrl.u32 %v293, 16
      %v394 = vshll.u32 %v293, 16
      %v396 = vrot.slane %v394, 1
      %v397 = vor.u32 %v392, %v396
      %v399 = vshll.u32 %v341, 16
      %v401 = vrot.slane %v399, 1
      %v402 = vsel %vm354, %v397, %v401
      %v404 = vshrl.u32 %v294, 16
      %v406 = vshll.u32 %v294, 16
      %v408 = vrot.slane %v406, 1
      %v409 = vor.u32 %v404, %v408
      %v411 = vshll.u32 %v342, 16
      %v413 = vrot.slane %v411, 1
      %v414 = vsel %vm354, %v409, %v413
      %v416 = vshrl.u32 %v295, 16
      %v418 = vshll.u32 %v295, 16
      %v420 = vrot.slane %v418, 1
      %v421 = vor.u32 %v416, %v420
      %v423 = vshll.u32 %v343, 16
      %v425 = vrot.slane %v423, 1
      %v426 = vsel %vm354, %v421, %v425
      %v428 = vshrl.u32 %v296, 16
      %v430 = vshll.u32 %v296, 16
      %v432 = vrot.slane %v430, 1
      %v433 = vor.u32 %v428, %v432
      %v435 = vshll.u32 %v344, 16
      %v437 = vrot.slane %v435, 1
      %v438 = vsel %vm354, %v433, %v437
      %v440 = vshrl.u32 %v297, 16
      %v442 = vshll.u32 %v297, 16
      %v444 = vrot.slane %v442, 1
      %v445 = vor.u32 %v440, %v444
      %v447 = vshll.u32 %v345, 16
      %v449 = vrot.slane %v447, 1
      %v450 = vsel %vm354, %v445, %v449
      %v452 = vshrl.u32 %v298, 16
      %v454 = vshll.u32 %v298, 16
      %v456 = vrot.slane %v454, 1
      %v457 = vor.u32 %v452, %v456
      %v459 = vshll.u32 %v346, 16
      %v461 = vrot.slane %v459, 1
      %v462 = vsel %vm354, %v457, %v461
      %v464 = vshrl.u32 %v299, 16
      %v466 = vshll.u32 %v299, 16
      %v468 = vrot.slane %v466, 1
      %v469 = vor.u32 %v464, %v468
      %v471 = vshll.u32 %v347, 16
      %v473 = vrot.slane %v471, 1
      %v474 = vsel %vm354, %v469, %v473
      %v476 = vshrl.u32 %v300, 16
      %v478 = vshll.u32 %v300, 16
      %v480 = vrot.slane %v478, 1
      %v481 = vor.u32 %v476, %v480
      %v483 = vshll.u32 %v348, 16
      %v485 = vrot.slane %v483, 1
      %v486 = vsel %vm354, %v481, %v485
      %v488 = vshrl.u32 %v301, 16
      %v490 = vshll.u32 %v301, 16
      %v492 = vrot.slane %v490, 1
      %v493 = vor.u32 %v488, %v492
      %v495 = vshll.u32 %v349, 16
      %v497 = vrot.slane %v495, 1
      %v498 = vsel %vm354, %v493, %v497
      %v500 = vshrl.u32 %v302, 16
      %v502 = vshll.u32 %v302, 16
      %v504 = vrot.slane %v502, 1
      %v505 = vor.u32 %v500, %v504
      %v507 = vshll.u32 %v350, 16
      %v509 = vrot.slane %v507, 1
      %v510 = vsel %vm354, %v505, %v509
      %v512 = vshrl.u32 %v303, 16
      %v514 = vshll.u32 %v303, 16
      %v516 = vrot.slane %v514, 1
      %v517 = vor.u32 %v512, %v516
      %v519 = vshll.u32 %v351, 16
      %v521 = vrot.slane %v519, 1
      %v522 = vsel %vm354, %v517, %v521
      %v524 = vshrl.u32 %v304, 16
      %v526 = vshll.u32 %v304, 16
      %v528 = vrot.slane %v526, 1
      %v529 = vor.u32 %v524, %v528
      %v531 = vshll.u32 %v352, 16
      %v533 = vrot.slane %v531, 1
      %v534 = vsel %vm354, %v529, %v533
      %v536 = vshrl.u32 %v305, 16
      %v538 = vshll.u32 %v305, 16
      %v540 = vrot.slane %v538, 1
      %v541 = vor.u32 %v536, %v540
      %v543 = vshll.u32 %v353, 16
      %v545 = vrot.slane %v543, 1
      %v546 = vsel %vm354, %v541, %v545
      %547 = vrot.lane.b32.xlu0 %v366, 4
      %v548 = vpop.permute.xlu0 %547
      %549 = vrot.lane.b32.xlu0 %v378, 4
      %v550 = vpop.permute.xlu0 %549
      %551 = vrot.lane.b32.xlu0 %v390, 4
      %v552 = vpop.permute.xlu0 %551
      %553 = vrot.lane.b32.xlu0 %v402, 4
      %v554 = vpop.permute.xlu0 %553
      %555 = vrot.lane.b32.xlu0 %v414, 4
      %v556 = vpop.permute.xlu0 %555
      %557 = vrot.lane.b32.xlu0 %v426, 4
      %v558 = vpop.permute.xlu0 %557
      %559 = vrot.lane.b32.xlu0 %v438, 4
      %v560 = vpop.permute.xlu0 %559
      %561 = vrot.lane.b32.xlu0 %v450, 4
      %v562 = vpop.permute.xlu0 %561
      %563 = vrot.lane.b32.xlu0 %v462, 4
      %v564 = vpop.permute.xlu0 %563
      %565 = vrot.lane.b32.xlu0 %v474, 4
      %v566 = vpop.permute.xlu0 %565
      %567 = vrot.lane.b32.xlu0 %v486, 4
      %v568 = vpop.permute.xlu0 %567
      %569 = vrot.lane.b32.xlu0 %v498, 4
      %v570 = vpop.permute.xlu0 %569
      %571 = vrot.lane.b32.xlu0 %v510, 4
      %v572 = vpop.permute.xlu0 %571
      %573 = vrot.lane.b32.xlu0 %v522, 4
      %v574 = vpop.permute.xlu0 %573
      %575 = vrot.lane.b32.xlu0 %v534, 4
      %v576 = vpop.permute.xlu0 %575
      %577 = vrot.lane.b32.xlu0 %v546, 4
      %v578 = vpop.permute.xlu0 %577
      %vm579 = vcmask 1046528
      %v580 = vrot.slane %v290, 1
      %v581 = vrot.slane %v338, 1
      %v582 = vsel %vm579, %v580, %v581
      %v583 = vrot.slane %v291, 1
      %v584 = vrot.slane %v339, 1
      %v585 = vsel %vm579, %v583, %v584
      %v586 = vrot.slane %v292, 1
      %v587 = vrot.slane %v340, 1
      %v588 = vsel %vm579, %v586, %v587
      %v589 = vrot.slane %v293, 1
      %v590 = vrot.slane %v341, 1
      %v591 = vsel %vm579, %v589, %v590
      %v592 = vrot.slane %v294, 1
      %v593 = vrot.slane %v342, 1
      %v594 = vsel %vm579, %v592, %v593
      %v595 = vrot.slane %v295, 1
      %v596 = vrot.slane %v343, 1
      %v597 = vsel %vm579, %v595, %v596
      %v598 = vrot.slane %v296, 1
      %v599 = vrot.slane %v344, 1
      %v600 = vsel %vm579, %v598, %v599
      %v601 = vrot.slane %v297, 1
      %v602 = vrot.slane %v345, 1
      %v603 = vsel %vm579, %v601, %v602
      %v604 = vrot.slane %v298, 1
      %v605 = vrot.slane %v346, 1
      %v606 = vsel %vm579, %v604, %v605
      %v607 = vrot.slane %v299, 1
      %v608 = vrot.slane %v347, 1
      %v609 = vsel %vm579, %v607, %v608
      %v610 = vrot.slane %v300, 1
      %v611 = vrot.slane %v348, 1
      %v612 = vsel %vm579, %v610, %v611
      %v613 = vrot.slane %v301, 1
      %v614 = vrot.slane %v349, 1
      %v615 = vsel %vm579, %v613, %v614
      %v616 = vrot.slane %v302, 1
      %v617 = vrot.slane %v350, 1
      %v618 = vsel %vm579, %v616, %v617
      %v619 = vrot.slane %v303, 1
      %v620 = vrot.slane %v351, 1
      %v621 = vsel %vm579, %v619, %v620
      %v622 = vrot.slane %v304, 1
      %v623 = vrot.slane %v352, 1
      %v624 = vsel %vm579, %v622, %v623
      %v625 = vrot.slane %v305, 1
      %v626 = vrot.slane %v353, 1
      %v627 = vsel %vm579, %v625, %v626
      %628 = vrot.lane.b32.xlu0 %v582, 8
      %v629 = vpop.permute.xlu0 %628
      %630 = vrot.lane.b32.xlu0 %v585, 8
      %v631 = vpop.permute.xlu0 %630
      %632 = vrot.lane.b32.xlu0 %v588, 8
      %v633 = vpop.permute.xlu0 %632
      %634 = vrot.lane.b32.xlu0 %v591, 8
      %v635 = vpop.permute.xlu0 %634
      %636 = vrot.lane.b32.xlu0 %v594, 8
      %v637 = vpop.permute.xlu0 %636
      %638 = vrot.lane.b32.xlu0 %v597, 8
      %v639 = vpop.permute.xlu0 %638
      %640 = vrot.lane.b32.xlu0 %v600, 8
      %v641 = vpop.permute.xlu0 %640
      %642 = vrot.lane.b32.xlu0 %v603, 8
      %v643 = vpop.permute.xlu0 %642
      %644 = vrot.lane.b32.xlu0 %v606, 8
      %v645 = vpop.permute.xlu0 %644
      %646 = vrot.lane.b32.xlu0 %v609, 8
      %v647 = vpop.permute.xlu0 %646
      %648 = vrot.lane.b32.xlu0 %v612, 8
      %v649 = vpop.permute.xlu0 %648
      %650 = vrot.lane.b32.xlu0 %v615, 8
      %v651 = vpop.permute.xlu0 %650
      %652 = vrot.lane.b32.xlu0 %v618, 8
      %v653 = vpop.permute.xlu0 %652
      %654 = vrot.lane.b32.xlu0 %v621, 8
      %v655 = vpop.permute.xlu0 %654
      %656 = vrot.lane.b32.xlu0 %v624, 8
      %v657 = vpop.permute.xlu0 %656
      %658 = vrot.lane.b32.xlu0 %v627, 8
      %v659 = vpop.permute.xlu0 %658
      %v662 = vunpack.c.l.b16 %v220
      %v663 = vunpack.c.l.b16 %v221
      %v664 = vpack.c.b16 %v663, %v662
      %665 = vrot.lane.b32.xlu0 %v291, 12
      %v666 = vpop.permute.xlu0 %665
      %667 = vrot.lane.b32.xlu0 %v292, 12
      %v668 = vpop.permute.xlu0 %667
      %669 = vrot.lane.b32.xlu0 %v293, 12
      %v670 = vpop.permute.xlu0 %669
      %671 = vrot.lane.b32.xlu0 %v294, 12
      %v672 = vpop.permute.xlu0 %671
      %673 = vrot.lane.b32.xlu0 %v295, 12
      %v674 = vpop.permute.xlu0 %673
      %675 = vrot.lane.b32.xlu0 %v296, 12
      %v676 = vpop.permute.xlu0 %675
      %677 = vrot.lane.b32.xlu0 %v297, 12
      %v678 = vpop.permute.xlu0 %677
      %679 = vrot.lane.b32.xlu0 %v298, 12
      %v680 = vpop.permute.xlu0 %679
      %681 = vrot.lane.b32.xlu0 %v299, 12
      %v682 = vpop.permute.xlu0 %681
      %683 = vrot.lane.b32.xlu0 %v300, 12
      %v684 = vpop.permute.xlu0 %683
      %685 = vrot.lane.b32.xlu0 %v301, 12
      %v686 = vpop.permute.xlu0 %685
      %687 = vrot.lane.b32.xlu0 %v302, 12
      %v688 = vpop.permute.xlu0 %687
      %689 = vrot.lane.b32.xlu0 %v303, 12
      %v690 = vpop.permute.xlu0 %689
      %691 = vrot.lane.b32.xlu0 %v304, 12
      %v692 = vpop.permute.xlu0 %691
      %693 = vrot.lane.b32.xlu0 %v305, 12
      %v694 = vpop.permute.xlu0 %693
      %695 = vrot.lane.b32.xlu0 %v664, 12
      %v696 = vpop.permute.xlu0 %695
      %v698 = vunpack.c.l.b16 %v222
      %v699 = vpack.c.b16 %v698, %v698
      %v701 = vshrl.u32 %v664, 16
      %v703 = vshll.u32 %v664, 16
      %v705 = vrot.slane %v703, 1
      %v706 = vor.u32 %v701, %v705
      %v708 = vshll.u32 %v699, 16
      %v710 = vrot.slane %v708, 1
      %v711 = vsel %vm354, %v706, %v710
      %712 = vrot.lane.b32.xlu0 %v378, 16
      %v713 = vpop.permute.xlu0 %712
      %714 = vrot.lane.b32.xlu0 %v390, 16
      %v715 = vpop.permute.xlu0 %714
      %716 = vrot.lane.b32.xlu0 %v402, 16
      %v717 = vpop.permute.xlu0 %716
      %718 = vrot.lane.b32.xlu0 %v414, 16
      %v719 = vpop.permute.xlu0 %718
      %720 = vrot.lane.b32.xlu0 %v426, 16
      %v721 = vpop.permute.xlu0 %720
      %722 = vrot.lane.b32.xlu0 %v438, 16
      %v723 = vpop.permute.xlu0 %722
      %724 = vrot.lane.b32.xlu0 %v450, 16
      %v725 = vpop.permute.xlu0 %724
      %726 = vrot.lane.b32.xlu0 %v462, 16
      %v727 = vpop.permute.xlu0 %726
      %728 = vrot.lane.b32.xlu0 %v474, 16
      %v729 = vpop.permute.xlu0 %728
      %730 = vrot.lane.b32.xlu0 %v486, 16
      %v731 = vpop.permute.xlu0 %730
      %732 = vrot.lane.b32.xlu0 %v498, 16
      %v733 = vpop.permute.xlu0 %732
      %734 = vrot.lane.b32.xlu0 %v510, 16
      %v735 = vpop.permute.xlu0 %734
      %736 = vrot.lane.b32.xlu0 %v522, 16
      %v737 = vpop.permute.xlu0 %736
      %738 = vrot.lane.b32.xlu0 %v534, 16
      %v739 = vpop.permute.xlu0 %738
      %740 = vrot.lane.b32.xlu0 %v546, 16
      %v741 = vpop.permute.xlu0 %740
      %742 = vrot.lane.b32.xlu0 %v711, 16
      %v743 = vpop.permute.xlu0 %742
      %v744 = vrot.slane %v664, 1
      %v745 = vrot.slane %v699, 1
      %v746 = vsel %vm579, %v744, %v745
      %747 = vrot.lane.b32.xlu0 %v585, 20
      %v748 = vpop.permute.xlu0 %747
      %749 = vrot.lane.b32.xlu0 %v588, 20
      %v750 = vpop.permute.xlu0 %749
      %751 = vrot.lane.b32.xlu0 %v591, 20
      %v752 = vpop.permute.xlu0 %751
      %753 = vrot.lane.b32.xlu0 %v594, 20
      %v754 = vpop.permute.xlu0 %753
      %755 = vrot.lane.b32.xlu0 %v597, 20
      %v756 = vpop.permute.xlu0 %755
      %757 = vrot.lane.b32.xlu0 %v600, 20
      %v758 = vpop.permute.xlu0 %757
      %759 = vrot.lane.b32.xlu0 %v603, 20
      %v760 = vpop.permute.xlu0 %759
      %761 = vrot.lane.b32.xlu0 %v606, 20
      %v762 = vpop.permute.xlu0 %761
      %763 = vrot.lane.b32.xlu0 %v609, 20
      %v764 = vpop.permute.xlu0 %763
      %765 = vrot.lane.b32.xlu0 %v612, 20
      %v766 = vpop.permute.xlu0 %765
      %767 = vrot.lane.b32.xlu0 %v615, 20
      %v768 = vpop.permute.xlu0 %767
      %769 = vrot.lane.b32.xlu0 %v618, 20
      %v770 = vpop.permute.xlu0 %769
      %771 = vrot.lane.b32.xlu0 %v621, 20
      %v772 = vpop.permute.xlu0 %771
      %773 = vrot.lane.b32.xlu0 %v624, 20
      %v774 = vpop.permute.xlu0 %773
      %775 = vrot.lane.b32.xlu0 %v627, 20
      %v776 = vpop.permute.xlu0 %775
      %777 = vrot.lane.b32.xlu0 %v746, 20
      %v778 = vpop.permute.xlu0 %777
      %v781 = vunpack.c.l.b16 %v223
      %v782 = vunpack.c.l.b16 %v224
      %v783 = vpack.c.b16 %v782, %v781
      %784 = vrot.lane.b32.xlu0 %v292, 24
      %v785 = vpop.permute.xlu0 %784
      %786 = vrot.lane.b32.xlu0 %v293, 24
      %v787 = vpop.permute.xlu0 %786
      %788 = vrot.lane.b32.xlu0 %v294, 24
      %v789 = vpop.permute.xlu0 %788
      %790 = vrot.lane.b32.xlu0 %v295, 24
      %v791 = vpop.permute.xlu0 %790
      %792 = vrot.lane.b32.xlu0 %v296, 24
      %v793 = vpop.permute.xlu0 %792
      %794 = vrot.lane.b32.xlu0 %v297, 24
      %v795 = vpop.permute.xlu0 %794
      %796 = vrot.lane.b32.xlu0 %v298, 24
      %v797 = vpop.permute.xlu0 %796
      %798 = vrot.lane.b32.xlu0 %v299, 24
      %v799 = vpop.permute.xlu0 %798
      %800 = vrot.lane.b32.xlu0 %v300, 24
      %v801 = vpop.permute.xlu0 %800
      %802 = vrot.lane.b32.xlu0 %v301, 24
      %v803 = vpop.permute.xlu0 %802
      %804 = vrot.lane.b32.xlu0 %v302, 24
      %v805 = vpop.permute.xlu0 %804
      %806 = vrot.lane.b32.xlu0 %v303, 24
      %v807 = vpop.permute.xlu0 %806
      %808 = vrot.lane.b32.xlu0 %v304, 24
      %v809 = vpop.permute.xlu0 %808
      %810 = vrot.lane.b32.xlu0 %v305, 24
      %v811 = vpop.permute.xlu0 %810
      %812 = vrot.lane.b32.xlu0 %v664, 24
      %v813 = vpop.permute.xlu0 %812
      %814 = vrot.lane.b32.xlu0 %v783, 24
      %v815 = vpop.permute.xlu0 %814
      %v817 = vunpack.c.l.b16 %v225
      %v818 = vpack.c.b16 %v817, %v817
      %v820 = vshrl.u32 %v783, 16
      %v822 = vshll.u32 %v783, 16
      %v824 = vrot.slane %v822, 1
      %v825 = vor.u32 %v820, %v824
      %v827 = vshll.u32 %v818, 16
      %v829 = vrot.slane %v827, 1
      %v830 = vsel %vm354, %v825, %v829
      %831 = vrot.lane.b32.xlu0 %v390, 28
      %v832 = vpop.permute.xlu0 %831
      %833 = vrot.lane.b32.xlu0 %v402, 28
      %v834 = vpop.permute.xlu0 %833
      %835 = vrot.lane.b32.xlu0 %v414, 28
      %v836 = vpop.permute.xlu0 %835
      %837 = vrot.lane.b32.xlu0 %v426, 28
      %v838 = vpop.permute.xlu0 %837
      %839 = vrot.lane.b32.xlu0 %v438, 28
      %v840 = vpop.permute.xlu0 %839
      %841 = vrot.lane.b32.xlu0 %v450, 28
      %v842 = vpop.permute.xlu0 %841
      %843 = vrot.lane.b32.xlu0 %v462, 28
      %v844 = vpop.permute.xlu0 %843
      %845 = vrot.lane.b32.xlu0 %v474, 28
      %v846 = vpop.permute.xlu0 %845
      %847 = vrot.lane.b32.xlu0 %v486, 28
      %v848 = vpop.permute.xlu0 %847
      %849 = vrot.lane.b32.xlu0 %v498, 28
      %v850 = vpop.permute.xlu0 %849
      %851 = vrot.lane.b32.xlu0 %v510, 28
      %v852 = vpop.permute.xlu0 %851
      %853 = vrot.lane.b32.xlu0 %v522, 28
      %v854 = vpop.permute.xlu0 %853
      %855 = vrot.lane.b32.xlu0 %v534, 28
      %v856 = vpop.permute.xlu0 %855
      %857 = vrot.lane.b32.xlu0 %v546, 28
      %v858 = vpop.permute.xlu0 %857
      %859 = vrot.lane.b32.xlu0 %v711, 28
      %v860 = vpop.permute.xlu0 %859
      %861 = vrot.lane.b32.xlu0 %v830, 28
      %v862 = vpop.permute.xlu0 %861
      %v863 = vrot.slane %v783, 1
      %v864 = vrot.slane %v818, 1
      %v865 = vsel %vm579, %v863, %v864
      %866 = vrot.lane.b32.xlu0 %v588, 32
      %v867 = vpop.permute.xlu0 %866
      %868 = vrot.lane.b32.xlu0 %v591, 32
      %v869 = vpop.permute.xlu0 %868
      %870 = vrot.lane.b32.xlu0 %v594, 32
      %v871 = vpop.permute.xlu0 %870
      %872 = vrot.lane.b32.xlu0 %v597, 32
      %v873 = vpop.permute.xlu0 %872
      %874 = vrot.lane.b32.xlu0 %v600, 32
      %v875 = vpop.permute.xlu0 %874
      %876 = vrot.lane.b32.xlu0 %v603, 32
      %v877 = vpop.permute.xlu0 %876
      %878 = vrot.lane.b32.xlu0 %v606, 32
      %v879 = vpop.permute.xlu0 %878
      %880 = vrot.lane.b32.xlu0 %v609, 32
      %v881 = vpop.permute.xlu0 %880
      %882 = vrot.lane.b32.xlu0 %v612, 32
      %v883 = vpop.permute.xlu0 %882
      %884 = vrot.lane.b32.xlu0 %v615, 32
      %v885 = vpop.permute.xlu0 %884
      %886 = vrot.lane.b32.xlu0 %v618, 32
      %v887 = vpop.permute.xlu0 %886
      %888 = vrot.lane.b32.xlu0 %v621, 32
      %v889 = vpop.permute.xlu0 %888
      %890 = vrot.lane.b32.xlu0 %v624, 32
      %v891 = vpop.permute.xlu0 %890
      %892 = vrot.lane.b32.xlu0 %v627, 32
      %v893 = vpop.permute.xlu0 %892
      %894 = vrot.lane.b32.xlu0 %v746, 32
      %v895 = vpop.permute.xlu0 %894
      %896 = vrot.lane.b32.xlu0 %v865, 32
      %v897 = vpop.permute.xlu0 %896
      %vm898 = vcmask 31744
      %v900 = vsel %vm898, %v290, %v548
      %v902 = vsel %vm898, %v291, %v550
      %v904 = vsel %vm898, %v292, %v552
      %v906 = vsel %vm898, %v293, %v554
      %v908 = vsel %vm898, %v294, %v556
      %v910 = vsel %vm898, %v295, %v558
      %v912 = vsel %vm898, %v296, %v560
      %v914 = vsel %vm898, %v297, %v562
      %v916 = vsel %vm898, %v298, %v564
      %v918 = vsel %vm898, %v299, %v566
      %v920 = vsel %vm898, %v300, %v568
      %v922 = vsel %vm898, %v301, %v570
      %v924 = vsel %vm898, %v302, %v572
      %v926 = vsel %vm898, %v303, %v574
      %v928 = vsel %vm898, %v304, %v576
      %v930 = vsel %vm898, %v305, %v578
      %vm931 = vcmask 64512
      %v933 = vsel %vm931, %v900, %v629
      %v935 = vsel %vm931, %v902, %v631
      %v937 = vsel %vm931, %v904, %v633
      %v939 = vsel %vm931, %v906, %v635
      %v941 = vsel %vm931, %v908, %v637
      %v943 = vsel %vm931, %v910, %v639
      %v945 = vsel %vm931, %v912, %v641
      %v947 = vsel %vm931, %v914, %v643
      %v949 = vsel %vm931, %v916, %v645
      %v951 = vsel %vm931, %v918, %v647
      %v953 = vsel %vm931, %v920, %v649
      %v955 = vsel %vm931, %v922, %v651
      %v957 = vsel %vm931, %v924, %v653
      %v959 = vsel %vm931, %v926, %v655
      %v961 = vsel %vm931, %v928, %v657
      %v963 = vsel %vm931, %v930, %v659
      %vm964 = vcmask 97280
      %v966 = vsel %vm964, %v933, %v666
      %v968 = vsel %vm964, %v935, %v668
      %v970 = vsel %vm964, %v937, %v670
      %v972 = vsel %vm964, %v939, %v672
      %v974 = vsel %vm964, %v941, %v674
      %v976 = vsel %vm964, %v943, %v676
      %v978 = vsel %vm964, %v945, %v678
      %v980 = vsel %vm964, %v947, %v680
      %v982 = vsel %vm964, %v949, %v682
      %v984 = vsel %vm964, %v951, %v684
      %v986 = vsel %vm964, %v953, %v686
      %v988 = vsel %vm964, %v955, %v688
      %v990 = vsel %vm964, %v957, %v690
      %v992 = vsel %vm964, %v959, %v692
      %v994 = vsel %vm964, %v961, %v694
      %v996 = vsel %vm964, %v963, %v696
      %vm997 = vcmask 130048
      %v999 = vsel %vm997, %v966, %v713
      %v1001 = vsel %vm997, %v968, %v715
      %v1003 = vsel %vm997, %v970, %v717
      %v1005 = vsel %vm997, %v972, %v719
      %v1007 = vsel %vm997, %v974, %v721
      %v1009 = vsel %vm997, %v976, %v723
      %v1011 = vsel %vm997, %v978, %v725
      %v1013 = vsel %vm997, %v980, %v727
      %v1015 = vsel %vm997, %v982, %v729
      %v1017 = vsel %vm997, %v984, %v731
      %v1019 = vsel %vm997, %v986, %v733
      %v1021 = vsel %vm997, %v988, %v735
      %v1023 = vsel %vm997, %v990, %v737
      %v1025 = vsel %vm997, %v992, %v739
      %v1027 = vsel %vm997, %v994, %v741
      %v1029 = vsel %vm997, %v996, %v743
      %vm1030 = vcmask 162816
      %v1032 = vsel %vm1030, %v999, %v748
      %v1034 = vsel %vm1030, %v1001, %v750
      %v1036 = vsel %vm1030, %v1003, %v752
      %v1038 = vsel %vm1030, %v1005, %v754
      %v1040 = vsel %vm1030, %v1007, %v756
      %v1042 = vsel %vm1030, %v1009, %v758
      %v1044 = vsel %vm1030, %v1011, %v760
      %v1046 = vsel %vm1030, %v1013, %v762
      %v1048 = vsel %vm1030, %v1015, %v764
      %v1050 = vsel %vm1030, %v1017, %v766
      %v1052 = vsel %vm1030, %v1019, %v768
      %v1054 = vsel %vm1030, %v1021, %v770
      %v1056 = vsel %vm1030, %v1023, %v772
      %v1058 = vsel %vm1030, %v1025, %v774
      %v1060 = vsel %vm1030, %v1027, %v776
      %v1062 = vsel %vm1030, %v1029, %v778
      %vm1063 = vcmask 195584
      %v1065 = vsel %vm1063, %v1032, %v785
      %v1067 = vsel %vm1063, %v1034, %v787
      %v1069 = vsel %vm1063, %v1036, %v789
      %v1071 = vsel %vm1063, %v1038, %v791
      %v1073 = vsel %vm1063, %v1040, %v793
      %v1075 = vsel %vm1063, %v1042, %v795
      %v1077 = vsel %vm1063, %v1044, %v797
      %v1079 = vsel %vm1063, %v1046, %v799
      %v1081 = vsel %vm1063, %v1048, %v801
      %v1083 = vsel %vm1063, %v1050, %v803
      %v1085 = vsel %vm1063, %v1052, %v805
      %v1087 = vsel %vm1063, %v1054, %v807
      %v1089 = vsel %vm1063, %v1056, %v809
      %v1091 = vsel %vm1063, %v1058, %v811
      %v1093 = vsel %vm1063, %v1060, %v813
      %v1095 = vsel %vm1063, %v1062, %v815
      %vm1096 = vcmask 228352
      %v1098 = vsel %vm1096, %v1065, %v832
      %v1100 = vsel %vm1096, %v1067, %v834
      %v1102 = vsel %vm1096, %v1069, %v836
      %v1104 = vsel %vm1096, %v1071, %v838
      %v1106 = vsel %vm1096, %v1073, %v840
      %v1108 = vsel %vm1096, %v1075, %v842
      %v1110 = vsel %vm1096, %v1077, %v844
      %v1112 = vsel %vm1096, %v1079, %v846
      %v1114 = vsel %vm1096, %v1081, %v848
      %v1116 = vsel %vm1096, %v1083, %v850
      %v1118 = vsel %vm1096, %v1085, %v852
      %v1120 = vsel %vm1096, %v1087, %v854
      %v1122 = vsel %vm1096, %v1089, %v856
      %v1124 = vsel %vm1096, %v1091, %v858
      %v1126 = vsel %vm1096, %v1093, %v860
      %v1128 = vsel %vm1096, %v1095, %v862
      %vm1129 = vcmask 261120
      %v1131 = vsel %vm1129, %v1098, %v867
      %v1133 = vsel %vm1129, %v1100, %v869
      %v1135 = vsel %vm1129, %v1102, %v871
      %v1137 = vsel %vm1129, %v1104, %v873
      %v1139 = vsel %vm1129, %v1106, %v875
      %v1141 = vsel %vm1129, %v1108, %v877
      %v1143 = vsel %vm1129, %v1110, %v879
      %v1145 = vsel %vm1129, %v1112, %v881
      %v1147 = vsel %vm1129, %v1114, %v883
      %v1149 = vsel %vm1129, %v1116, %v885
      %v1151 = vsel %vm1129, %v1118, %v887
      %v1153 = vsel %vm1129, %v1120, %v889
      %v1155 = vsel %vm1129, %v1122, %v891
      %v1157 = vsel %vm1129, %v1124, %v893
      %v1159 = vsel %vm1129, %v1126, %v895
      %v1161 = vsel %vm1129, %v1128, %v897
      %v1162 = vld [vmem:[%s1] sm:$0xf]
      %v1163 = vld [vmem:[%s1 + $0x4] sm:$0xf]
      %v1164 = vld [vmem:[%s1 + $0x8] sm:$0xf]
      %v1165 = vld [vmem:[%s1 + $0xc] sm:$0xf]
      %v1166 = vld [vmem:[%s1 + $0x10] sm:$0x3]
      %v1167 = vld [vmem:[%s2] sm:$0x1]
      %v1169 = vlaneseq
      %v1170 = vshrl.u32 %v1169, 7
      %v1171 = vsub.s32 0, %v1170
      %v1172 = vrot.slane %v1167, %v1171
      %v1179 = vunpack.c.l.b16 %v1162
      %v1180 = vunpack.c.l.b16 %v1163
      %v1181 = vunpack.c.l.b16 %v1164
      %v1182 = vunpack.c.l.b16 %v1165
      %v1183 = vunpack.c.l.b16 %v1166
      %v1184 = vpack.c.b16 %v1180, %v1179
      %v1185 = vpack.c.b16 %v1182, %v1181
      %v1186 = vpack.c.b16 %v1183, %v1183
      %vm1189 = vcmask 293888
      %v1190 = vsel %vm1189, %v1131, 0
      %v1192 = vsel %vm1189, %v1133, 0
      %v1194 = vsel %vm1189, %v1135, 0
      %v1196 = vsel %vm1189, %v1137, 0
      %v1198 = vsel %vm1189, %v1139, 0
      %v1200 = vsel %vm1189, %v1141, 0
      %v1202 = vsel %vm1189, %v1143, 0
      %v1204 = vsel %vm1189, %v1145, 0
      %v1206 = vsel %vm1189, %v1147, 0
      %v1208 = vsel %vm1189, %v1149, 0
      %v1210 = vsel %vm1189, %v1151, 0
      %v1212 = vsel %vm1189, %v1153, 0
      %v1214 = vsel %vm1189, %v1155, 0
      %v1216 = vsel %vm1189, %v1157, 0
      %v1218 = vsel %vm1189, %v1159, 0
      %v1220 = vsel %vm1189, %v1161, 0
      %vm1222 = vcmask 1041408
      %v1224 = vsel %vm1222, %v1186, 0
      %1226 = vmatprep.subr.bf16.mxu0 0
      %1227 = vmatpush1.bf16.msra.mxu0 %v1184
      %1228 = vmatprep.subr.bf16.mxu0 0
      %1229 = vmatpush1.bf16.msra.mxu0 %v1185
      %1230 = vmatprep.subr.bf16.mxu0 0
      %1231 = vmatpush1.bf16.msra.mxu0 %v1224
      %1232 = vmatprep.subr.bf16.mxu0 0
      %1233 = vmatpush1.bf16.msra.mxu0 0
      %1234 = vmatprep.subr.bf16.mxu0 0
      %1235 = vmatpush1.bf16.msra.mxu0 0
      %1236 = vmatprep.subr.bf16.mxu0 0
      %1237 = vmatpush1.bf16.msra.mxu0 0
      %1238 = vmatprep.subr.bf16.mxu0 0
      %1239 = vmatpush1.bf16.msra.mxu0 0
      %1240 = vmatprep.subr.bf16.mxu0 0
      %1241 = vmatpush1.bf16.msra.mxu0 0
      %1242 = vmatprep.subr.bf16.mxu0 0
      %1243 = vmatpush1.bf16.msra.mxu0 0
      %1244 = vmatprep.subr.bf16.mxu0 0
      %1245 = vmatpush1.bf16.msra.mxu0 0
      %1246 = vmatprep.subr.bf16.mxu0 0
      %1247 = vmatpush1.bf16.msra.mxu0 0
      %1248 = vmatprep.subr.bf16.mxu0 0
      %1249 = vmatpush1.bf16.msra.mxu0 0
      %1250 = vmatprep.subr.bf16.mxu0 0
      %1251 = vmatpush1.bf16.msra.mxu0 0
      %1252 = vmatprep.subr.bf16.mxu0 0
      %1253 = vmatpush1.bf16.msra.mxu0 0
      %1254 = vmatprep.subr.bf16.mxu0 0
      %1255 = vmatpush1.bf16.msra.mxu0 0
      %1256 = vmatprep.subr.bf16.mxu0 0
      %1257 = vmatpush1.bf16.msra.mxu0 0
      %1258 = vmatprep.mubr.bf16.mxu0 0
      %1259 = vmatmul.mubr.bf16.gmra.mrb[0].mxu0 %v1190
      %v1260 = vpop.f32.mrb[0].mxu0
      %v1261 = vadd.f32 %v1172, %v1260
      %v1262 = vpop.f32.mrb[0].mxu0
      %v1263 = vpop.f32.mrb[0].mxu0
      %v1264 = vadd.f32 %v1172, %v1263
      %v1265 = vpop.f32.mrb[0].mxu0
      %1266 = vmatprep.mubr.bf16.mxu0 0
      %1267 = vmatmul.mubr.bf16.gmra.mrb[0].mxu0 %v1192
      %v1268 = vpop.f32.mrb[0].mxu0
      %v1269 = vadd.f32 %v1172, %v1268
      %v1270 = vpop.f32.mrb[0].mxu0
      %v1271 = vpop.f32.mrb[0].mxu0
      %v1272 = vadd.f32 %v1172, %v1271
      %v1273 = vpop.f32.mrb[0].mxu0
      %1274 = vmatprep.mubr.bf16.mxu0 0
      %1275 = vmatmul.mubr.bf16.gmra.mrb[0].mxu0 %v1194
      %v1276 = vpop.f32.mrb[0].mxu0
      %v1277 = vadd.f32 %v1172, %v1276
      %v1278 = vpop.f32.mrb[0].mxu0
      %v1279 = vpop.f32.mrb[0].mxu0
      %v1280 = vadd.f32 %v1172, %v1279
      %v1281 = vpop.f32.mrb[0].mxu0
      %1282 = vmatprep.mubr.bf16.mxu0 0
      %1283 = vmatmul.mubr.bf16.gmra.mrb[0].mxu0 %v1196
      %v1284 = vpop.f32.mrb[0].mxu0
      %v1285 = vadd.f32 %v1172, %v1284
      %v1286 = vpop.f32.mrb[0].mxu0
      %v1287 = vpop.f32.mrb[0].mxu0
      %v1288 = vadd.f32 %v1172, %v1287
      %v1289 = vpop.f32.mrb[0].mxu0
      %1290 = vmatprep.mubr.bf16.mxu0 0
      %1291 = vmatmul.mubr.bf16.gmra.mrb[0].mxu0 %v1198
      %v1292 = vpop.f32.mrb[0].mxu0
      %v1293 = vadd.f32 %v1172, %v1292
      %v1294 = vpop.f32.mrb[0].mxu0
      %v1295 = vpop.f32.mrb[0].mxu0
      %v1296 = vadd.f32 %v1172, %v1295
      %v1297 = vpop.f32.mrb[0].mxu0
      %1298 = vmatprep.mubr.bf16.mxu0 0
      %1299 = vmatmul.mubr.bf16.gmra.mrb[0].mxu0 %v1200
      %v1300 = vpop.f32.mrb[0].mxu0
      %v1301 = vadd.f32 %v1172, %v1300
      %v1302 = vpop.f32.mrb[0].mxu0
      %v1303 = vpop.f32.mrb[0].mxu0
      %v1304 = vadd.f32 %v1172, %v1303
      %v1305 = vpop.f32.mrb[0].mxu0
      %1306 = vmatprep.mubr.bf16.mxu0 0
      %1307 = vmatmul.mubr.bf16.gmra.mrb[0].mxu0 %v1202
      %v1308 = vpop.f32.mrb[0].mxu0
      %v1309 = vadd.f32 %v1172, %v1308
      %v1310 = vpop.f32.mrb[0].mxu0
      %v1311 = vpop.f32.mrb[0].mxu0
      %v1312 = vadd.f32 %v1172, %v1311
      %v1313 = vpop.f32.mrb[0].mxu0
      %1314 = vmatprep.mubr.bf16.mxu0 0
      %1315 = vmatmul.mubr.bf16.gmra.mrb[0].mxu0 %v1204
      %v1316 = vpop.f32.mrb[0].mxu0
      %v1317 = vadd.f32 %v1172, %v1316
      %v1318 = vpop.f32.mrb[0].mxu0
      %v1319 = vpop.f32.mrb[0].mxu0
      %v1320 = vadd.f32 %v1172, %v1319
      %v1321 = vpop.f32.mrb[0].mxu0
      %1322 = vmatprep.mubr.bf16.mxu0 0
      %1323 = vmatmul.mubr.bf16.gmra.mrb[0].mxu0 %v1206
      %v1324 = vpop.f32.mrb[0].mxu0
      %v1325 = vadd.f32 %v1172, %v1324
      %v1326 = vpop.f32.mrb[0].mxu0
      %v1327 = vpop.f32.mrb[0].mxu0
      %v1328 = vadd.f32 %v1172, %v1327
      %v1329 = vpop.f32.mrb[0].mxu0
      %1330 = vmatprep.mubr.bf16.mxu0 0
      %1331 = vmatmul.mubr.bf16.gmra.mrb[0].mxu0 %v1208
      %v1332 = vpop.f32.mrb[0].mxu0
      %v1333 = vadd.f32 %v1172, %v1332
      %v1334 = vpop.f32.mrb[0].mxu0
      %v1335 = vpop.f32.mrb[0].mxu0
      %v1336 = vadd.f32 %v1172, %v1335
      %v1337 = vpop.f32.mrb[0].mxu0
      %1338 = vmatprep.mubr.bf16.mxu0 0
      %1339 = vmatmul.mubr.bf16.gmra.mrb[0].mxu0 %v1210
      %v1340 = vpop.f32.mrb[0].mxu0
      %v1341 = vadd.f32 %v1172, %v1340
      %v1342 = vpop.f32.mrb[0].mxu0
      %v1343 = vpop.f32.mrb[0].mxu0
      %v1344 = vadd.f32 %v1172, %v1343
      %v1345 = vpop.f32.mrb[0].mxu0
      %1346 = vmatprep.mubr.bf16.mxu0 0
      %1347 = vmatmul.mubr.bf16.gmra.mrb[0].mxu0 %v1212
      %v1348 = vpop.f32.mrb[0].mxu0
      %v1349 = vadd.f32 %v1172, %v1348
      %v1350 = vpop.f32.mrb[0].mxu0
      %v1351 = vpop.f32.mrb[0].mxu0
      %v1352 = vadd.f32 %v1172, %v1351
      %v1353 = vpop.f32.mrb[0].mxu0
      %1354 = vmatprep.mubr.bf16.mxu0 0
      %1355 = vmatmul.mubr.bf16.gmra.mrb[0].mxu0 %v1214
      %v1356 = vpop.f32.mrb[0].mxu0
      %v1357 = vadd.f32 %v1172, %v1356
      %v1358 = vpop.f32.mrb[0].mxu0
      %v1359 = vpop.f32.mrb[0].mxu0
      %v1360 = vadd.f32 %v1172, %v1359
      %v1361 = vpop.f32.mrb[0].mxu0
      %1362 = vmatprep.mubr.bf16.mxu0 0
      %1363 = vmatmul.mubr.bf16.gmra.mrb[0].mxu0 %v1216
      %v1364 = vpop.f32.mrb[0].mxu0
      %v1365 = vadd.f32 %v1172, %v1364
      %v1366 = vpop.f32.mrb[0].mxu0
      %v1367 = vpop.f32.mrb[0].mxu0
      %v1368 = vadd.f32 %v1172, %v1367
      %v1369 = vpop.f32.mrb[0].mxu0
      %1370 = vmatprep.mubr.bf16.mxu0 0
      %1371 = vmatmul.mubr.bf16.gmra.mrb[0].mxu0 %v1218
      %v1372 = vpop.f32.mrb[0].mxu0
      %v1373 = vadd.f32 %v1172, %v1372
      %v1374 = vpop.f32.mrb[0].mxu0
      %v1375 = vpop.f32.mrb[0].mxu0
      %v1376 = vadd.f32 %v1172, %v1375
      %v1377 = vpop.f32.mrb[0].mxu0
      %1378 = vmatprep.mubr.bf16.mxu0 0
      %1379 = vmatmul.mubr.bf16.gmra.mrb[0].mxu0 %v1220
      %v1380 = vpop.f32.mrb[0].mxu0
      %v1381 = vadd.f32 %v1172, %v1380
      %v1382 = vpop.f32.mrb[0].mxu0
      %v1383 = vpop.f32.mrb[0].mxu0
      %v1384 = vadd.f32 %v1172, %v1383
      %v1385 = vpop.f32.mrb[0].mxu0
      %1386 = vdwg.mxu0
      %v1387 = vpack.c.bf16 %v1264, %v1261
      %v1388 = vpack.c.bf16 %v1272, %v1269
      %v1389 = vpack.c.bf16 %v1280, %v1277
      %v1390 = vpack.c.bf16 %v1288, %v1285
      %v1391 = vpack.c.bf16 %v1296, %v1293
      %v1392 = vpack.c.bf16 %v1304, %v1301
      %v1393 = vpack.c.bf16 %v1312, %v1309
      %v1394 = vpack.c.bf16 %v1320, %v1317
      %v1395 = vpack.c.bf16 %v1328, %v1325
      %v1396 = vpack.c.bf16 %v1336, %v1333
      %v1397 = vpack.c.bf16 %v1344, %v1341
      %v1398 = vpack.c.bf16 %v1352, %v1349
      %v1399 = vpack.c.bf16 %v1360, %v1357
      %v1400 = vpack.c.bf16 %v1368, %v1365
      %v1401 = vpack.c.bf16 %v1376, %v1373
      %v1402 = vpack.c.bf16 %v1384, %v1381
      %v1419 = vunpack.c.l.b16 %v1387
      %v1420 = vunpack.c.l.b16 %v1388
      %v1421 = vunpack.c.l.b16 %v1389
      %v1422 = vunpack.c.l.b16 %v1390
      %v1423 = vunpack.c.l.b16 %v1391
      %v1424 = vunpack.c.l.b16 %v1392
      %v1425 = vunpack.c.l.b16 %v1393
      %v1426 = vunpack.c.l.b16 %v1394
      %v1427 = vunpack.c.l.b16 %v1395
      %v1428 = vunpack.c.l.b16 %v1396
      %v1429 = vunpack.c.l.b16 %v1397
      %v1430 = vunpack.c.l.b16 %v1398
      %v1431 = vunpack.c.l.b16 %v1399
      %v1432 = vunpack.c.l.b16 %v1400
      %v1433 = vunpack.c.l.b16 %v1401
      %v1434 = vunpack.c.l.b16 %v1402
      %v1435 = vrot.slane %v1420, 7
      %vm1436 = vcmask 1041409
      %v1437 = vsel %vm1436, %v1435, %v1419
      %v1438 = vrot.slane %v1421, 6
      %vm1439 = vcmask 1042434
      %v1440 = vsel %vm1439, %v1438, %v1437
      %v1441 = vrot.slane %v1422, 5
      %vm1442 = vcmask 1043459
      %v1443 = vsel %vm1442, %v1441, %v1440
      %v1444 = vrot.slane %v1423, 4
      %vm1445 = vcmask 1044484
      %v1446 = vsel %vm1445, %v1444, %v1443
      %v1447 = vrot.slane %v1424, 3
      %vm1448 = vcmask 1045509
      %v1449 = vsel %vm1448, %v1447, %v1446
      %v1450 = vrot.slane %v1425, 2
      %vm1451 = vcmask 1046534
      %v1452 = vsel %vm1451, %v1450, %v1449
      %v1453 = vrot.slane %v1426, 1
      %vm1454 = vcmask 1047559
      %v1455 = vsel %vm1454, %v1453, %v1452
      %v1456 = vrot.slane %v1428, 7
      %v1457 = vsel %vm1436, %v1456, %v1427
      %v1458 = vrot.slane %v1429, 6
      %v1459 = vsel %vm1439, %v1458, %v1457
      %v1460 = vrot.slane %v1430, 5
      %v1461 = vsel %vm1442, %v1460, %v1459
      %v1462 = vrot.slane %v1431, 4
      %v1463 = vsel %vm1445, %v1462, %v1461
      %v1464 = vrot.slane %v1432, 3
      %v1465 = vsel %vm1448, %v1464, %v1463
      %v1466 = vrot.slane %v1433, 2
      %v1467 = vsel %vm1451, %v1466, %v1465
      %v1468 = vrot.slane %v1434, 1
      %v1469 = vsel %vm1454, %v1468, %v1467
      %v1470 = vpack.c.b16 %v1469, %v1455
      %v1471 = vrot.slane %v1419, 1
      %v1472 = vsel %vm1436, %v1420, %v1471
      %v1473 = vrot.slane %v1421, 7
      %v1474 = vsel %vm1439, %v1473, %v1472
      %v1475 = vrot.slane %v1422, 6
      %v1476 = vsel %vm1442, %v1475, %v1474
      %v1477 = vrot.slane %v1423, 5
      %v1478 = vsel %vm1445, %v1477, %v1476
      %v1479 = vrot.slane %v1424, 4
      %v1480 = vsel %vm1448, %v1479, %v1478
      %v1481 = vrot.slane %v1425, 3
      %v1482 = vsel %vm1451, %v1481, %v1480
      %v1483 = vrot.slane %v1426, 2
      %v1484 = vsel %vm1454, %v1483, %v1482
      %v1485 = vrot.slane %v1427, 1
      %v1486 = vsel %vm1436, %v1428, %v1485
      %v1487 = vrot.slane %v1429, 7
      %v1488 = vsel %vm1439, %v1487, %v1486
      %v1489 = vrot.slane %v1430, 6
      %v1490 = vsel %vm1442, %v1489, %v1488
      %v1491 = vrot.slane %v1431, 5
      %v1492 = vsel %vm1445, %v1491, %v1490
      %v1493 = vrot.slane %v1432, 4
      %v1494 = vsel %vm1448, %v1493, %v1492
      %v1495 = vrot.slane %v1433, 3
      %v1496 = vsel %vm1451, %v1495, %v1494
      %v1497 = vrot.slane %v1434, 2
      %v1498 = vsel %vm1454, %v1497, %v1496
      %v1499 = vpack.c.b16 %v1498, %v1484
      %1500 = vrot.lane.b32.xlu0 %v1499, 16
      %v1501 = vpop.permute.xlu0 %1500
      %v1502 = vrot.slane %v1419, 2
      %v1503 = vrot.slane %v1420, 1
      %v1504 = vsel %vm1436, %v1503, %v1502
      %v1505 = vsel %vm1439, %v1421, %v1504
      %v1506 = vrot.slane %v1422, 7
      %v1507 = vsel %vm1442, %v1506, %v1505
      %v1508 = vrot.slane %v1423, 6
      %v1509 = vsel %vm1445, %v1508, %v1507
      %v1510 = vrot.slane %v1424, 5
      %v1511 = vsel %vm1448, %v1510, %v1509
      %v1512 = vrot.slane %v1425, 4
      %v1513 = vsel %vm1451, %v1512, %v1511
      %v1514 = vrot.slane %v1426, 3
      %v1515 = vsel %vm1454, %v1514, %v1513
      %v1516 = vrot.slane %v1427, 2
      %v1517 = vrot.slane %v1428, 1
      %v1518 = vsel %vm1436, %v1517, %v1516
      %v1519 = vsel %vm1439, %v1429, %v1518
      %v1520 = vrot.slane %v1430, 7
      %v1521 = vsel %vm1442, %v1520, %v1519
      %v1522 = vrot.slane %v1431, 6
      %v1523 = vsel %vm1445, %v1522, %v1521
      %v1524 = vrot.slane %v1432, 5
      %v1525 = vsel %vm1448, %v1524, %v1523
      %v1526 = vrot.slane %v1433, 4
      %v1527 = vsel %vm1451, %v1526, %v1525
      %v1528 = vrot.slane %v1434, 3
      %v1529 = vsel %vm1454, %v1528, %v1527
      %v1530 = vpack.c.b16 %v1529, %v1515
      %1531 = vrot.lane.b32.xlu0 %v1530, 32
      %v1532 = vpop.permute.xlu0 %1531
      %v1533 = vrot.slane %v1419, 3
      %v1534 = vrot.slane %v1420, 2
      %v1535 = vsel %vm1436, %v1534, %v1533
      %v1536 = vrot.slane %v1421, 1
      %v1537 = vsel %vm1439, %v1536, %v1535
      %v1538 = vsel %vm1442, %v1422, %v1537
      %v1539 = vrot.slane %v1423, 7
      %v1540 = vsel %vm1445, %v1539, %v1538
      %v1541 = vrot.slane %v1424, 6
      %v1542 = vsel %vm1448, %v1541, %v1540
      %v1543 = vrot.slane %v1425, 5
      %v1544 = vsel %vm1451, %v1543, %v1542
      %v1545 = vrot.slane %v1426, 4
      %v1546 = vsel %vm1454, %v1545, %v1544
      %v1547 = vrot.slane %v1427, 3
      %v1548 = vrot.slane %v1428, 2
      %v1549 = vsel %vm1436, %v1548, %v1547
      %v1550 = vrot.slane %v1429, 1
      %v1551 = vsel %vm1439, %v1550, %v1549
      %v1552 = vsel %vm1442, %v1430, %v1551
      %v1553 = vrot.slane %v1431, 7
      %v1554 = vsel %vm1445, %v1553, %v1552
      %v1555 = vrot.slane %v1432, 6
      %v1556 = vsel %vm1448, %v1555, %v1554
      %v1557 = vrot.slane %v1433, 5
      %v1558 = vsel %vm1451, %v1557, %v1556
      %v1559 = vrot.slane %v1434, 4
      %v1560 = vsel %vm1454, %v1559, %v1558
      %v1561 = vpack.c.b16 %v1560, %v1546
      %1562 = vrot.lane.b32.xlu0 %v1561, 48
      %v1563 = vpop.permute.xlu0 %1562
      %v1564 = vrot.slane %v1419, 4
      %v1565 = vrot.slane %v1420, 3
      %v1566 = vsel %vm1436, %v1565, %v1564
      %v1567 = vrot.slane %v1421, 2
      %v1568 = vsel %vm1439, %v1567, %v1566
      %v1569 = vrot.slane %v1422, 1
      %v1570 = vsel %vm1442, %v1569, %v1568
      %v1571 = vsel %vm1445, %v1423, %v1570
      %v1572 = vrot.slane %v1424, 7
      %v1573 = vsel %vm1448, %v1572, %v1571
      %v1574 = vrot.slane %v1425, 6
      %v1575 = vsel %vm1451, %v1574, %v1573
      %v1576 = vrot.slane %v1426, 5
      %v1577 = vsel %vm1454, %v1576, %v1575
      %v1578 = vrot.slane %v1427, 4
      %v1579 = vrot.slane %v1428, 3
      %v1580 = vsel %vm1436, %v1579, %v1578
      %v1581 = vrot.slane %v1429, 2
      %v1582 = vsel %vm1439, %v1581, %v1580
      %v1583 = vrot.slane %v1430, 1
      %v1584 = vsel %vm1442, %v1583, %v1582
      %v1585 = vsel %vm1445, %v1431, %v1584
      %v1586 = vrot.slane %v1432, 7
      %v1587 = vsel %vm1448, %v1586, %v1585
      %v1588 = vrot.slane %v1433, 6
      %v1589 = vsel %vm1451, %v1588, %v1587
      %v1590 = vrot.slane %v1434, 5
      %v1591 = vsel %vm1454, %v1590, %v1589
      %v1592 = vpack.c.b16 %v1591, %v1577
      %1593 = vrot.lane.b32.xlu0 %v1592, 64
      %v1594 = vpop.permute.xlu0 %1593
      %v1595 = vrot.slane %v1419, 5
      %v1596 = vrot.slane %v1420, 4
      %v1597 = vsel %vm1436, %v1596, %v1595
      %v1598 = vrot.slane %v1421, 3
      %v1599 = vsel %vm1439, %v1598, %v1597
      %v1600 = vrot.slane %v1422, 2
      %v1601 = vsel %vm1442, %v1600, %v1599
      %v1602 = vrot.slane %v1423, 1
      %v1603 = vsel %vm1445, %v1602, %v1601
      %v1604 = vsel %vm1448, %v1424, %v1603
      %v1605 = vrot.slane %v1425, 7
      %v1606 = vsel %vm1451, %v1605, %v1604
      %v1607 = vrot.slane %v1426, 6
      %v1608 = vsel %vm1454, %v1607, %v1606
      %v1609 = vrot.slane %v1427, 5
      %v1610 = vrot.slane %v1428, 4
      %v1611 = vsel %vm1436, %v1610, %v1609
      %v1612 = vrot.slane %v1429, 3
      %v1613 = vsel %vm1439, %v1612, %v1611
      %v1614 = vrot.slane %v1430, 2
      %v1615 = vsel %vm1442, %v1614, %v1613
      %v1616 = vrot.slane %v1431, 1
      %v1617 = vsel %vm1445, %v1616, %v1615
      %v1618 = vsel %vm1448, %v1432, %v1617
      %v1619 = vrot.slane %v1433, 7
      %v1620 = vsel %vm1451, %v1619, %v1618
      %v1621 = vrot.slane %v1434, 6
      %v1622 = vsel %vm1454, %v1621, %v1620
      %v1623 = vpack.c.b16 %v1622, %v1608
      %1624 = vrot.lane.b32.xlu0 %v1623, 80
      %v1625 = vpop.permute.xlu0 %1624
      %v1626 = vrot.slane %v1419, 6
      %v1627 = vrot.slane %v1420, 5
      %v1628 = vsel %vm1436, %v1627, %v1626
      %v1629 = vrot.slane %v1421, 4
      %v1630 = vsel %vm1439, %v1629, %v1628
      %v1631 = vrot.slane %v1422, 3
      %v1632 = vsel %vm1442, %v1631, %v1630
      %v1633 = vrot.slane %v1423, 2
      %v1634 = vsel %vm1445, %v1633, %v1632
      %v1635 = vrot.slane %v1424, 1
      %v1636 = vsel %vm1448, %v1635, %v1634
      %v1637 = vsel %vm1451, %v1425, %v1636
      %v1638 = vrot.slane %v1426, 7
      %v1639 = vsel %vm1454, %v1638, %v1637
      %v1640 = vrot.slane %v1427, 6
      %v1641 = vrot.slane %v1428, 5
      %v1642 = vsel %vm1436, %v1641, %v1640
      %v1643 = vrot.slane %v1429, 4
      %v1644 = vsel %vm1439, %v1643, %v1642
      %v1645 = vrot.slane %v1430, 3
      %v1646 = vsel %vm1442, %v1645, %v1644
      %v1647 = vrot.slane %v1431, 2
      %v1648 = vsel %vm1445, %v1647, %v1646
      %v1649 = vrot.slane %v1432, 1
      %v1650 = vsel %vm1448, %v1649, %v1648
      %v1651 = vsel %vm1451, %v1433, %v1650
      %v1652 = vrot.slane %v1434, 7
      %v1653 = vsel %vm1454, %v1652, %v1651
      %v1654 = vpack.c.b16 %v1653, %v1639
      %1655 = vrot.lane.b32.xlu0 %v1654, 96
      %v1656 = vpop.permute.xlu0 %1655
      %v1657 = vrot.slane %v1419, 7
      %v1658 = vrot.slane %v1420, 6
      %v1659 = vsel %vm1436, %v1658, %v1657
      %v1660 = vrot.slane %v1421, 5
      %v1661 = vsel %vm1439, %v1660, %v1659
      %v1662 = vrot.slane %v1422, 4
      %v1663 = vsel %vm1442, %v1662, %v1661
      %v1664 = vrot.slane %v1423, 3
      %v1665 = vsel %vm1445, %v1664, %v1663
      %v1666 = vrot.slane %v1424, 2
      %v1667 = vsel %vm1448, %v1666, %v1665
      %v1668 = vrot.slane %v1425, 1
      %v1669 = vsel %vm1451, %v1668, %v1667
      %v1670 = vsel %vm1454, %v1426, %v1669
      %v1671 = vrot.slane %v1427, 7
      %v1672 = vrot.slane %v1428, 6
      %v1673 = vsel %vm1436, %v1672, %v1671
      %v1674 = vrot.slane %v1429, 5
      %v1675 = vsel %vm1439, %v1674, %v1673
      %v1676 = vrot.slane %v1430, 4
      %v1677 = vsel %vm1442, %v1676, %v1675
      %v1678 = vrot.slane %v1431, 3
      %v1679 = vsel %vm1445, %v1678, %v1677
      %v1680 = vrot.slane %v1432, 2
      %v1681 = vsel %vm1448, %v1680, %v1679
      %v1682 = vrot.slane %v1433, 1
      %v1683 = vsel %vm1451, %v1682, %v1681
      %v1684 = vsel %vm1454, %v1434, %v1683
      %v1685 = vpack.c.b16 %v1684, %v1670
      %1686 = vrot.lane.b32.xlu0 %v1685, 112
      %v1687 = vpop.permute.xlu0 %1686
      %v1688 = vunpack.c.h.b16 %v1387
      %v1689 = vunpack.c.h.b16 %v1388
      %v1690 = vunpack.c.h.b16 %v1389
      %v1691 = vunpack.c.h.b16 %v1390
      %v1692 = vunpack.c.h.b16 %v1391
      %v1693 = vunpack.c.h.b16 %v1392
      %v1694 = vunpack.c.h.b16 %v1393
      %v1695 = vunpack.c.h.b16 %v1394
      %v1696 = vunpack.c.h.b16 %v1395
      %v1697 = vunpack.c.h.b16 %v1396
      %v1698 = vunpack.c.h.b16 %v1397
      %v1699 = vunpack.c.h.b16 %v1398
      %v1700 = vunpack.c.h.b16 %v1399
      %v1701 = vunpack.c.h.b16 %v1400
      %v1702 = vunpack.c.h.b16 %v1401
      %v1703 = vunpack.c.h.b16 %v1402
      %v1704 = vrot.slane %v1689, 7
      %v1705 = vsel %vm1436, %v1704, %v1688
      %v1706 = vrot.slane %v1690, 6
      %v1707 = vsel %vm1439, %v1706, %v1705
      %v1708 = vrot.slane %v1691, 5
      %v1709 = vsel %vm1442, %v1708, %v1707
      %v1710 = vrot.slane %v1692, 4
      %v1711 = vsel %vm1445, %v1710, %v1709
      %v1712 = vrot.slane %v1693, 3
      %v1713 = vsel %vm1448, %v1712, %v1711
      %v1714 = vrot.slane %v1694, 2
      %v1715 = vsel %vm1451, %v1714, %v1713
      %v1716 = vrot.slane %v1695, 1
      %v1717 = vsel %vm1454, %v1716, %v1715
      %v1718 = vrot.slane %v1697, 7
      %v1719 = vsel %vm1436, %v1718, %v1696
      %v1720 = vrot.slane %v1698, 6
      %v1721 = vsel %vm1439, %v1720, %v1719
      %v1722 = vrot.slane %v1699, 5
      %v1723 = vsel %vm1442, %v1722, %v1721
      %v1724 = vrot.slane %v1700, 4
      %v1725 = vsel %vm1445, %v1724, %v1723
      %v1726 = vrot.slane %v1701, 3
      %v1727 = vsel %vm1448, %v1726, %v1725
      %v1728 = vrot.slane %v1702, 2
      %v1729 = vsel %vm1451, %v1728, %v1727
      %v1730 = vrot.slane %v1703, 1
      %v1731 = vsel %vm1454, %v1730, %v1729
      %v1732 = vpack.c.b16 %v1731, %v1717
      %v1733 = vrot.slane %v1688, 1
      %v1734 = vsel %vm1436, %v1689, %v1733
      %v1735 = vrot.slane %v1690, 7
      %v1736 = vsel %vm1439, %v1735, %v1734
      %v1737 = vrot.slane %v1691, 6
      %v1738 = vsel %vm1442, %v1737, %v1736
      %v1739 = vrot.slane %v1692, 5
      %v1740 = vsel %vm1445, %v1739, %v1738
      %v1741 = vrot.slane %v1693, 4
      %v1742 = vsel %vm1448, %v1741, %v1740
      %v1743 = vrot.slane %v1694, 3
      %v1744 = vsel %vm1451, %v1743, %v1742
      %v1745 = vrot.slane %v1695, 2
      %v1746 = vsel %vm1454, %v1745, %v1744
      %v1747 = vrot.slane %v1696, 1
      %v1748 = vsel %vm1436, %v1697, %v1747
      %v1749 = vrot.slane %v1698, 7
      %v1750 = vsel %vm1439, %v1749, %v1748
      %v1751 = vrot.slane %v1699, 6
      %v1752 = vsel %vm1442, %v1751, %v1750
      %v1753 = vrot.slane %v1700, 5
      %v1754 = vsel %vm1445, %v1753, %v1752
      %v1755 = vrot.slane %v1701, 4
      %v1756 = vsel %vm1448, %v1755, %v1754
      %v1757 = vrot.slane %v1702, 3
      %v1758 = vsel %vm1451, %v1757, %v1756
      %v1759 = vrot.slane %v1703, 2
      %v1760 = vsel %vm1454, %v1759, %v1758
      %v1761 = vpack.c.b16 %v1760, %v1746
      %1762 = vrot.lane.b32.xlu0 %v1761, 16
      %v1763 = vpop.permute.xlu0 %1762
      %v1764 = vrot.slane %v1688, 2
      %v1765 = vrot.slane %v1689, 1
      %v1766 = vsel %vm1436, %v1765, %v1764
      %v1767 = vsel %vm1439, %v1690, %v1766
      %v1768 = vrot.slane %v1691, 7
      %v1769 = vsel %vm1442, %v1768, %v1767
      %v1770 = vrot.slane %v1692, 6
      %v1771 = vsel %vm1445, %v1770, %v1769
      %v1772 = vrot.slane %v1693, 5
      %v1773 = vsel %vm1448, %v1772, %v1771
      %v1774 = vrot.slane %v1694, 4
      %v1775 = vsel %vm1451, %v1774, %v1773
      %v1776 = vrot.slane %v1695, 3
      %v1777 = vsel %vm1454, %v1776, %v1775
      %v1778 = vrot.slane %v1696, 2
      %v1779 = vrot.slane %v1697, 1
      %v1780 = vsel %vm1436, %v1779, %v1778
      %v1781 = vsel %vm1439, %v1698, %v1780
      %v1782 = vrot.slane %v1699, 7
      %v1783 = vsel %vm1442, %v1782, %v1781
      %v1784 = vrot.slane %v1700, 6
      %v1785 = vsel %vm1445, %v1784, %v1783
      %v1786 = vrot.slane %v1701, 5
      %v1787 = vsel %vm1448, %v1786, %v1785
      %v1788 = vrot.slane %v1702, 4
      %v1789 = vsel %vm1451, %v1788, %v1787
      %v1790 = vrot.slane %v1703, 3
      %v1791 = vsel %vm1454, %v1790, %v1789
      %v1792 = vpack.c.b16 %v1791, %v1777
      %1793 = vrot.lane.b32.xlu0 %v1792, 32
      %v1794 = vpop.permute.xlu0 %1793
      %v1795 = vrot.slane %v1688, 3
      %v1796 = vrot.slane %v1689, 2
      %v1797 = vsel %vm1436, %v1796, %v1795
      %v1798 = vrot.slane %v1690, 1
      %v1799 = vsel %vm1439, %v1798, %v1797
      %v1800 = vsel %vm1442, %v1691, %v1799
      %v1801 = vrot.slane %v1692, 7
      %v1802 = vsel %vm1445, %v1801, %v1800
      %v1803 = vrot.slane %v1693, 6
      %v1804 = vsel %vm1448, %v1803, %v1802
      %v1805 = vrot.slane %v1694, 5
      %v1806 = vsel %vm1451, %v1805, %v1804
      %v1807 = vrot.slane %v1695, 4
      %v1808 = vsel %vm1454, %v1807, %v1806
      %v1809 = vrot.slane %v1696, 3
      %v1810 = vrot.slane %v1697, 2
      %v1811 = vsel %vm1436, %v1810, %v1809
      %v1812 = vrot.slane %v1698, 1
      %v1813 = vsel %vm1439, %v1812, %v1811
      %v1814 = vsel %vm1442, %v1699, %v1813
      %v1815 = vrot.slane %v1700, 7
      %v1816 = vsel %vm1445, %v1815, %v1814
      %v1817 = vrot.slane %v1701, 6
      %v1818 = vsel %vm1448, %v1817, %v1816
      %v1819 = vrot.slane %v1702, 5
      %v1820 = vsel %vm1451, %v1819, %v1818
      %v1821 = vrot.slane %v1703, 4
      %v1822 = vsel %vm1454, %v1821, %v1820
      %v1823 = vpack.c.b16 %v1822, %v1808
      %1824 = vrot.lane.b32.xlu0 %v1823, 48
      %v1825 = vpop.permute.xlu0 %1824
      %v1826 = vrot.slane %v1688, 4
      %v1827 = vrot.slane %v1689, 3
      %v1828 = vsel %vm1436, %v1827, %v1826
      %v1829 = vrot.slane %v1690, 2
      %v1830 = vsel %vm1439, %v1829, %v1828
      %v1831 = vrot.slane %v1691, 1
      %v1832 = vsel %vm1442, %v1831, %v1830
      %v1833 = vsel %vm1445, %v1692, %v1832
      %v1834 = vrot.slane %v1693, 7
      %v1835 = vsel %vm1448, %v1834, %v1833
      %v1836 = vrot.slane %v1694, 6
      %v1837 = vsel %vm1451, %v1836, %v1835
      %v1838 = vrot.slane %v1695, 5
      %v1839 = vsel %vm1454, %v1838, %v1837
      %v1840 = vrot.slane %v1696, 4
      %v1841 = vrot.slane %v1697, 3
      %v1842 = vsel %vm1436, %v1841, %v1840
      %v1843 = vrot.slane %v1698, 2
      %v1844 = vsel %vm1439, %v1843, %v1842
      %v1845 = vrot.slane %v1699, 1
      %v1846 = vsel %vm1442, %v1845, %v1844
      %v1847 = vsel %vm1445, %v1700, %v1846
      %v1848 = vrot.slane %v1701, 7
      %v1849 = vsel %vm1448, %v1848, %v1847
      %v1850 = vrot.slane %v1702, 6
      %v1851 = vsel %vm1451, %v1850, %v1849
      %v1852 = vrot.slane %v1703, 5
      %v1853 = vsel %vm1454, %v1852, %v1851
      %v1854 = vpack.c.b16 %v1853, %v1839
      %1855 = vrot.lane.b32.xlu0 %v1854, 64
      %v1856 = vpop.permute.xlu0 %1855
      %v1857 = vrot.slane %v1688, 5
      %v1858 = vrot.slane %v1689, 4
      %v1859 = vsel %vm1436, %v1858, %v1857
      %v1860 = vrot.slane %v1690, 3
      %v1861 = vsel %vm1439, %v1860, %v1859
      %v1862 = vrot.slane %v1691, 2
      %v1863 = vsel %vm1442, %v1862, %v1861
      %v1864 = vrot.slane %v1692, 1
      %v1865 = vsel %vm1445, %v1864, %v1863
      %v1866 = vsel %vm1448, %v1693, %v1865
      %v1867 = vrot.slane %v1694, 7
      %v1868 = vsel %vm1451, %v1867, %v1866
      %v1869 = vrot.slane %v1695, 6
      %v1870 = vsel %vm1454, %v1869, %v1868
      %v1871 = vrot.slane %v1696, 5
      %v1872 = vrot.slane %v1697, 4
      %v1873 = vsel %vm1436, %v1872, %v1871
      %v1874 = vrot.slane %v1698, 3
      %v1875 = vsel %vm1439, %v1874, %v1873
      %v1876 = vrot.slane %v1699, 2
      %v1877 = vsel %vm1442, %v1876, %v1875
      %v1878 = vrot.slane %v1700, 1
      %v1879 = vsel %vm1445, %v1878, %v1877
      %v1880 = vsel %vm1448, %v1701, %v1879
      %v1881 = vrot.slane %v1702, 7
      %v1882 = vsel %vm1451, %v1881, %v1880
      %v1883 = vrot.slane %v1703, 6
      %v1884 = vsel %vm1454, %v1883, %v1882
      %v1885 = vpack.c.b16 %v1884, %v1870
      %1886 = vrot.lane.b32.xlu0 %v1885, 80
      %v1887 = vpop.permute.xlu0 %1886
      %v1888 = vrot.slane %v1688, 6
      %v1889 = vrot.slane %v1689, 5
      %v1890 = vsel %vm1436, %v1889, %v1888
      %v1891 = vrot.slane %v1690, 4
      %v1892 = vsel %vm1439, %v1891, %v1890
      %v1893 = vrot.slane %v1691, 3
      %v1894 = vsel %vm1442, %v1893, %v1892
      %v1895 = vrot.slane %v1692, 2
      %v1896 = vsel %vm1445, %v1895, %v1894
      %v1897 = vrot.slane %v1693, 1
      %v1898 = vsel %vm1448, %v1897, %v1896
      %v1899 = vsel %vm1451, %v1694, %v1898
      %v1900 = vrot.slane %v1695, 7
      %v1901 = vsel %vm1454, %v1900, %v1899
      %v1902 = vrot.slane %v1696, 6
      %v1903 = vrot.slane %v1697, 5
      %v1904 = vsel %vm1436, %v1903, %v1902
      %v1905 = vrot.slane %v1698, 4
      %v1906 = vsel %vm1439, %v1905, %v1904
      %v1907 = vrot.slane %v1699, 3
      %v1908 = vsel %vm1442, %v1907, %v1906
      %v1909 = vrot.slane %v1700, 2
      %v1910 = vsel %vm1445, %v1909, %v1908
      %v1911 = vrot.slane %v1701, 1
      %v1912 = vsel %vm1448, %v1911, %v1910
      %v1913 = vsel %vm1451, %v1702, %v1912
      %v1914 = vrot.slane %v1703, 7
      %v1915 = vsel %vm1454, %v1914, %v1913
      %v1916 = vpack.c.b16 %v1915, %v1901
      %1917 = vrot.lane.b32.xlu0 %v1916, 96
      %v1918 = vpop.permute.xlu0 %1917
      %v1919 = vrot.slane %v1688, 7
      %v1920 = vrot.slane %v1689, 6
      %v1921 = vsel %vm1436, %v1920, %v1919
      %v1922 = vrot.slane %v1690, 5
      %v1923 = vsel %vm1439, %v1922, %v1921
      %v1924 = vrot.slane %v1691, 4
      %v1925 = vsel %vm1442, %v1924, %v1923
      %v1926 = vrot.slane %v1692, 3
      %v1927 = vsel %vm1445, %v1926, %v1925
      %v1928 = vrot.slane %v1693, 2
      %v1929 = vsel %vm1448, %v1928, %v1927
      %v1930 = vrot.slane %v1694, 1
      %v1931 = vsel %vm1451, %v1930, %v1929
      %v1932 = vsel %vm1454, %v1695, %v1931
      %v1933 = vrot.slane %v1696, 7
      %v1934 = vrot.slane %v1697, 6
      %v1935 = vsel %vm1436, %v1934, %v1933
      %v1936 = vrot.slane %v1698, 5
      %v1937 = vsel %vm1439, %v1936, %v1935
      %v1938 = vrot.slane %v1699, 4
      %v1939 = vsel %vm1442, %v1938, %v1937
      %v1940 = vrot.slane %v1700, 3
      %v1941 = vsel %vm1445, %v1940, %v1939
      %v1942 = vrot.slane %v1701, 2
      %v1943 = vsel %vm1448, %v1942, %v1941
      %v1944 = vrot.slane %v1702, 1
      %v1945 = vsel %vm1451, %v1944, %v1943
      %v1946 = vsel %vm1454, %v1703, %v1945
      %v1947 = vpack.c.b16 %v1946, %v1932
      %1948 = vrot.lane.b32.xlu0 %v1947, 112
      %v1949 = vpop.permute.xlu0 %1948
      %v1952 = vsel %vm997, %v1470, %v1501
      %v1954 = vsel %vm1129, %v1952, %v1532
      %vm1955 = vcmask 392192
      %v1957 = vsel %vm1955, %v1954, %v1563
      %vm1958 = vcmask 523264
      %v1960 = vsel %vm1958, %v1957, %v1594
      %vm1961 = vcmask 654336
      %v1963 = vsel %vm1961, %v1960, %v1625
      %vm1964 = vcmask 785408
      %v1966 = vsel %vm1964, %v1963, %v1656
      %vm1967 = vcmask 916480
      %v1969 = vsel %vm1967, %v1966, %v1687
      %v1972 = vsel %vm997, %v1732, %v1763
      %v1974 = vsel %vm1129, %v1972, %v1794
      %v1976 = vsel %vm1955, %v1974, %v1825
      %v1978 = vsel %vm1958, %v1976, %v1856
      %v1980 = vsel %vm1961, %v1978, %v1887
      %v1982 = vsel %vm1964, %v1980, %v1918
      %v1984 = vsel %vm1967, %v1982, %v1949
      %v1987 = vunpack.c.l.b16 %v1969
      %v1988 = vunpack.c.l.b16 %v1984
      %v1989 = vunpack.c.h.b16 %v1969
      %v1990 = vunpack.c.h.b16 %v1984
      %v1991 = vpack.c.b16 %v1988, %v1987
      %v1992 = vpack.c.b16 %v1990, %v1989
      %1995 = vst [vmem:[%s170] sm:$0xff] %v1991
      %1996 = vst [vmem:[%s170 + $0x8] sm:$0xff] %v1992
      %p1997 = scmp.lt.s32.totalorder %s14, 1
      %s1998 = scalar_select %p1997, %s14, 1
      %s1999 = smul.addr %s1998, 4
      %s2000 = smul.addr %s1999, 4
      %s2001 = scalar_lea.vmem %s3, %s2000
      // Predicated region
      $region33: #{_lambda_.1} parent=31 // pred_check
        %p2002 = pneg %p100
      $region34: #{_lambda_.1} parent=31 // pred_check_branch
        %2004 = sbr.rel (%p2002) target = $region36
      $region35: #{_lambda_.1} parent=31 // pred_region
        _
      $region36: #{_lambda_.1} parent=31 // pred_fallthru
        _
    $region32: #{_lambda_.1} parent=5 // pred_fallthru
      _
    %p2005 = scmp.le.s32.totalorder 2, %s9
    // Predicated region
    $region37: #{_lambda_.1} parent=5 // pred_check
      %p2006 = pneg %p2005
    $region38: #{_lambda_.1} parent=5 // pred_check_branch
      %2008 = sbr.rel (%p2006) target = $region40
    $region39: #{_lambda_.1} parent=5 // pred_region
      %s2009 = ssub.s32 %s9, 2
      // Predicated region
      $region41: #{_lambda_.1} parent=39 // pred_check
        %p2010 = pneg %p106
      $region42: #{_lambda_.1} parent=39 // pred_check_branch
        %2012 = sbr.rel (%p2010) target = $region44
      $region43: #{_lambda_.1} parent=39 // pred_region
        %p2013 = scmp.lt.s32.totalorder %s15, 1
        %s2014 = scalar_select %p2013, %s15, 1
        %s2015 = smul.addr %s2014, 4
        %s2016 = smul.addr %s2015, 4
        %s2017 = scalar_lea.vmem %s3, %s2016
      $region44: #{_lambda_.1} parent=39 // pred_fallthru
        _
    $region40: #{_lambda_.1} parent=5 // pred_fallthru
      _
  $region6: #{_lambda_.1} parent=0 // loop_footer
    %s13 = sadd.s32 1, %s9
  $region7: #{_lambda_.1} parent=0 // loop_footer_branch
    %8 = sbr.rel target = $region3
  $region8: #{_lambda_.1} parent=0 // loop_exit
    _

</llo_original>
